<compile_context>
chip_gen: v6e
topology: v6e:2x2x1
jax: 0.10.0
libtpu: 0.0.40
codegen_flags: <defaults>
</compile_context>

<pallas_src>
import math

import jax
import jax.numpy as jnp
from jax import lax
from jax.experimental import pallas as pl
from jax.experimental.pallas import tpu as pltpu


# ---------------------------------------------------------------------------
# Fused kernel: whole OnlyPGA stack on one (features, TM-pixel) tile
# ---------------------------------------------------------------------------
def _fused_pga_kernel(
    x_ref,        # (1, C, TM)   input pixel tile (feature-major)
    d_ref,        # (N, E)       prototypes (bf16, readout)
    ds_ref,       # (N, E)       prototypes pre-scaled by 1/sqrt(E) (bf16, scores)
    w0_ref,       # (C, E)       first PGA projection (bf16)
    wstack_ref,   # (6, E, E)    [down1, pga2, down2, pga3, down3, pga4] (bf16)
    bstack_ref,   # (7, E, 1)    biases in layer order (f32)
    wo_ref,       # (E, NC)      output head weight (bf16)
    bo_ref,       # (NC, 1)      output head bias (f32)
    o_ref,        # (1, NC, TM)  logits tile (feature-major, lane-dense)
):
    d = d_ref[...]     # (N, E) bf16
    ds = ds_ref[...]   # (N, E) bf16, already * 1/sqrt(E)

    def proj(h, w, b):
        # conv1x1 in feature-major: (Cin, TM) -> (Cout, TM); contract Cin dims.
        y = lax.dot_general(
            w, h.astype(jnp.bfloat16), (((0,), (0,)), ((), ())),
            preferred_element_type=jnp.float32)
        return y + b  # b: (Cout, 1) broadcasts over lanes

    def pga(h, w, b):
        f = proj(h, w, b)                                   # (E, TM) f32
        fb = f.astype(jnp.bfloat16)
        # prototype scores: (N, E) . (E, TM) -> (N, TM)
        s = jnp.dot(ds, fb, preferred_element_type=jnp.float32)
        s = s - jnp.max(s, axis=0, keepdims=True)
        p = jnp.exp(s)
        a = p * pl.reciprocal(jnp.sum(p, axis=0, keepdims=True), approx=True)
        # prototype readout (contract N) + residual: (E, TM)
        r = lax.dot_general(
            d, a.astype(jnp.bfloat16), (((0,), (0,)), ((), ())),
            preferred_element_type=jnp.float32)
        return f + r

    h = x_ref[0].astype(jnp.float32)                        # (C, TM)

    h = pga(h, w0_ref[...], bstack_ref[0])                  # block_pga1
    h = proj(h, wstack_ref[0], bstack_ref[1])               # down1
    h = pga(h, wstack_ref[1], bstack_ref[2])                # block_pga2
    h = proj(h, wstack_ref[2], bstack_ref[3])               # down2
    h = pga(h, wstack_ref[3], bstack_ref[4])                # block_pga3
    h = proj(h, wstack_ref[4], bstack_ref[5])               # down3
    h = pga(h, wstack_ref[5], bstack_ref[6])                # block_pga4

    # output head: (E, NC)^T . (E, TM) -> (NC, TM), already lane-dense
    logits = lax.dot_general(
        wo_ref[...], h.astype(jnp.bfloat16), (((0,), (0,)), ((), ())),
        preferred_element_type=jnp.float32)
    o_ref[0] = (logits + bo_ref[...]).astype(o_ref.dtype)


# ---------------------------------------------------------------------------
# Tiling helper
# ---------------------------------------------------------------------------
def _choose_pixel_tile(P, B, cap=8192):
    """Pixel tile (lane dim): big to amortize per-step overhead, 128-aligned
    (or full extent), dividing P when possible to avoid a pad copy, and
    keeping >= 2 grid steps so v7x's two TensorCores both get work."""
    if P <= cap:
        tm = P
        if B == 1 and P >= 256 and (P // 2) % 128 == 0:
            tm = P // 2  # keep >=2 grid steps even for a single batch
        return tm
    # largest multiple of 128 that divides P and fits the cap -> no padding
    for k in range(cap // 128, 0, -1):
        tm = k * 128
        if P % tm == 0:
            return tm
    return cap  # fallback: ragged tail handled by pad+crop


# ---------------------------------------------------------------------------
# Wrapper
# ---------------------------------------------------------------------------
def only_pga_forward(x, obj_dict, bg_dict, params):
    wp, bp, wd, bd, wo, bo = params
    B, C, H, W = x.shape
    E, NC = wo.shape
    P = H * W

    # NCHW is already feature-major per pixel row: just flatten spatial dims.
    x3 = x.reshape(B, C, P)

    tm = _choose_pixel_tile(P, B)
    p_pad = pl.cdiv(P, tm) * tm
    if p_pad != P:  # rare fallback; divisor search usually avoids this copy
        x3 = jnp.pad(x3, ((0, 0), (0, 0), (0, p_pad - P)))

    # Prototypes: concat, pre-scale score copy, cast matmul operands to bf16.
    dict_all = jnp.concatenate([obj_dict, bg_dict], axis=0).astype(jnp.float32)
    dict_scaled = dict_all * (1.0 / math.sqrt(E))
    d_bf = dict_all.astype(jnp.bfloat16)
    ds_bf = dict_scaled.astype(jnp.bfloat16)

    # Consolidate weights / biases into a few stacked operands (layer order).
    w0 = wp[0].astype(jnp.bfloat16)                                 # (C, E)
    wstack = jnp.stack([wd[0], wp[1], wd[1], wp[2], wd[2], wp[3]]
                       ).astype(jnp.bfloat16)                       # (6, E, E)
    bstack = jnp.stack([bp[0], bd[0], bp[1], bd[1], bp[2], bd[2], bp[3]]
                       ).reshape(7, E, 1).astype(jnp.float32)       # (7, E, 1)
    wo_bf = wo.astype(jnp.bfloat16)                                 # (E, NC)
    bo2 = bo.reshape(NC, 1).astype(jnp.float32)                     # (NC, 1)

    def rep(a):  # small grid-invariant operand, replicated across grid steps
        nd = a.ndim
        return pl.BlockSpec(a.shape, lambda b, p, _nd=nd: (0,) * _nd)

    in_specs = [
        pl.BlockSpec((1, C, tm), lambda b, p: (b, 0, p)),   # x tile
        rep(d_bf), rep(ds_bf),
        rep(w0), rep(wstack), rep(bstack),
        rep(wo_bf), rep(bo2),
    ]
    out_specs = pl.BlockSpec((1, NC, tm), lambda b, p: (b, 0, p))

    logits = pl.pallas_call(
        _fused_pga_kernel,
        out_shape=jax.ShapeDtypeStruct((B, NC, p_pad), jnp.float32),
        grid=(B, p_pad // tm),
        in_specs=in_specs,
        out_specs=out_specs,
        compiler_params=pltpu.CompilerParams(
            dimension_semantics=("parallel", "parallel"),
            vmem_limit_bytes=48 * 1024 * 1024,
        ),
    )(x3, d_bf, ds_bf, w0, wstack, bstack, wo_bf, bo2)

    if p_pad != P:
        logits = logits[:, :, :P]
    return logits.reshape(B, NC, H, W)   # pure reshape, no transpose


_forward_jit = jax.jit(only_pga_forward)


# ---------------------------------------------------------------------------
# OnlyPGA module (parameters + forward glue)
# ---------------------------------------------------------------------------
class OnlyPGA:
    def __init__(self, channels, n_classes, embedding_dims, img_crop=320, key=None):
        self.channels = channels
        self.n_classes = n_classes
        self.embedding_dims = embedding_dims
        self.img_crop = img_crop
        if key is None:
            key = jax.random.PRNGKey(42)
        ks = jax.random.split(key, 16)
        E, C, NC = embedding_dims, channels, n_classes

        def winit(k, cin, cout):
            return jax.random.normal(k, (cin, cout), jnp.float32) * (1.0 / math.sqrt(cin))

        # BlockPGA projection weights (channels->E, then E->E three times)
        wp = [winit(ks[0], C, E), winit(ks[1], E, E),
              winit(ks[2], E, E), winit(ks[3], E, E)]
        bp = [jax.random.normal(ks[4 + i], (E,), jnp.float32) * 0.01 for i in range(4)]
        # down1..3 (E->E 1x1 convs)
        wd = [winit(ks[8 + i], E, E) for i in range(3)]
        bd = [jax.random.normal(ks[11 + i], (E,), jnp.float32) * 0.01 for i in range(3)]
        # output head (E->n_classes 1x1 conv)
        wo = winit(ks[14], E, NC)
        bo = jax.random.normal(ks[15], (NC,), jnp.float32) * 0.01

        self.params = (tuple(wp), tuple(bp), tuple(wd), tuple(bd), wo, bo)

    def __call__(self, x, obj_dict, bg_dict):
        """x: NCHW [B, C, H, W]; obj_dict/bg_dict: [N_obj, E] / [N_bg, E]."""
        return _forward_jit(x, obj_dict, bg_dict, self.params)


# ---------------------------------------------------------------------------
if __name__ == "__main__":
    B, C, H, W = 2, 4, 16, 16
    E, NC = 32, 3
    N_OBJ, N_BG = 8, 8

    key = jax.random.PRNGKey(0)
    kx, ko, kb, kp = jax.random.split(key, 4)
    x = jax.random.normal(kx, (B, C, H, W), jnp.float32)
    obj_dict = jax.random.normal(ko, (N_OBJ, E), jnp.float32)
    bg_dict = jax.random.normal(kb, (N_BG, E), jnp.float32)

    model = OnlyPGA(channels=C, n_classes=NC, embedding_dims=E, img_crop=H, key=kp)
    logits = model(x, obj_dict, bg_dict)
    jax.block_until_ready(logits)

    assert logits.shape == (B, NC, H, W), logits.shape
    assert logits.dtype == jnp.float32
    assert bool(jnp.all(jnp.isfinite(logits)))
    print("KERNEL_OK")
</pallas_src>

<mosaic_0001>
module attributes {stable_mosaic.version = 11 : i64} {
  func.func @_fused_pga_kernel(%arg0: i32, %arg1: i32, %arg2: memref<1x4x256xf32, #tpu.memory_space<vmem>>, %arg3: memref<16x32xbf16, #tpu.memory_space<vmem>>, %arg4: memref<16x32xbf16, #tpu.memory_space<vmem>>, %arg5: memref<4x32xbf16, #tpu.memory_space<vmem>>, %arg6: memref<6x32x32xbf16, #tpu.memory_space<vmem>>, %arg7: memref<7x32x1xf32, #tpu.memory_space<vmem>>, %arg8: memref<32x3xbf16, #tpu.memory_space<vmem>>, %arg9: memref<3x1xf32, #tpu.memory_space<vmem>>, %arg10: memref<1x3x256xf32, #tpu.memory_space<vmem>>) attributes {dimension_semantics = [#tpu.dimension_semantics<parallel>, #tpu.dimension_semantics<parallel>], iteration_bounds = array<i64: 2, 1>, scalar_prefetch = 0 : i64, scratch_operands = 0 : i64, tpu.core_type = #tpu.core_type<tc>, window_params = [{transform_indices = @transform_0, window_bounds = array<i64: 1, 4, 256>}, {pipeline_mode = #tpu.pipeline_mode<synchronous>, transform_indices = @transform_1, window_bounds = array<i64: 16, 32>}, {pipeline_mode = #tpu.pipeline_mode<synchronous>, transform_indices = @transform_2, window_bounds = array<i64: 16, 32>}, {pipeline_mode = #tpu.pipeline_mode<synchronous>, transform_indices = @transform_3, window_bounds = array<i64: 4, 32>}, {pipeline_mode = #tpu.pipeline_mode<synchronous>, transform_indices = @transform_4, window_bounds = array<i64: 6, 32, 32>}, {pipeline_mode = #tpu.pipeline_mode<synchronous>, transform_indices = @transform_5, window_bounds = array<i64: 7, 32, 1>}, {pipeline_mode = #tpu.pipeline_mode<synchronous>, transform_indices = @transform_6, window_bounds = array<i64: 32, 3>}, {pipeline_mode = #tpu.pipeline_mode<synchronous>, transform_indices = @transform_7, window_bounds = array<i64: 3, 1>}, {transform_indices = @transform_8, window_bounds = array<i64: 1, 3, 256>}]} {
    %c0 = arith.constant 0 : index
    %c0_0 = arith.constant 0 : index
    %0 = vector.load %arg3[%c0, %c0_0] : memref<16x32xbf16, #tpu.memory_space<vmem>>, vector<16x32xbf16>
    %c0_1 = arith.constant 0 : index
    %c0_2 = arith.constant 0 : index
    %1 = vector.load %arg4[%c0_1, %c0_2] : memref<16x32xbf16, #tpu.memory_space<vmem>>, vector<16x32xbf16>
    %c0_3 = arith.constant 0 : index
    %c0_4 = arith.constant 0 : index
    %c0_5 = arith.constant 0 : index
    %2 = vector.load %arg2[%c0_3, %c0_4, %c0_5] : memref<1x4x256xf32, #tpu.memory_space<vmem>>, vector<1x4x256xf32>
    %3 = vector.shape_cast %2 : vector<1x4x256xf32> to vector<4x256xf32>
    %c0_6 = arith.constant 0 : index
    %c0_7 = arith.constant 0 : index
    %4 = vector.load %arg5[%c0_6, %c0_7] : memref<4x32xbf16, #tpu.memory_space<vmem>>, vector<4x32xbf16>
    %c0_8 = arith.constant 0 : index
    %c0_9 = arith.constant 0 : index
    %c0_10 = arith.constant 0 : index
    %5 = vector.load %arg7[%c0_8, %c0_9, %c0_10] : memref<7x32x1xf32, #tpu.memory_space<vmem>>, vector<1x32x1xf32>
    %6 = vector.shape_cast %5 : vector<1x32x1xf32> to vector<32x1xf32>
    %7 = arith.truncf %3 : vector<4x256xf32> to vector<4x256xbf16>
    %cst = arith.constant dense<0.000000e+00> : vector<32x256xf32>
    %8 = tpu.matmul %4, %7, %cst {dimension_numbers = #tpu.dot_dimension_numbers<[0], [0], [1], [1], [0, 1, 1, 1], [], []>} : vector<4x32xbf16>, vector<4x256xbf16>, vector<32x256xf32> -> vector<32x256xf32>
    %9 = vector.broadcast %6 : vector<32x1xf32> to vector<32x256xf32>
    %10 = arith.addf %8, %9 : vector<32x256xf32>
    %11 = arith.truncf %10 : vector<32x256xf32> to vector<32x256xbf16>
    %cst_11 = arith.constant dense<0.000000e+00> : vector<16x256xf32>
    %12 = tpu.matmul %1, %11, %cst_11 {dimension_numbers = #tpu.dot_dimension_numbers<[1], [0], [0], [1], [0, 0, 1, 1], [], []>} : vector<16x32xbf16>, vector<32x256xbf16>, vector<16x256xf32> -> vector<16x256xf32>
    %cst_12 = arith.constant dense<0xFF800000> : vector<256xf32>
    %13 = vector.multi_reduction <maximumf>, %12, %cst_12 [0] : vector<16x256xf32> to vector<256xf32>
    %14 = vector.shape_cast %13 : vector<256xf32> to vector<1x256xf32>
    %15 = vector.broadcast %14 : vector<1x256xf32> to vector<16x256xf32>
    %16 = arith.subf %12, %15 : vector<16x256xf32>
    %17 = math.exp %16 : vector<16x256xf32>
    %cst_13 = arith.constant dense<0.000000e+00> : vector<256xf32>
    %18 = vector.multi_reduction <add>, %17, %cst_13 [0] : vector<16x256xf32> to vector<256xf32>
    %19 = vector.shape_cast %18 : vector<256xf32> to vector<1x256xf32>
    %20 = tpu.reciprocal %19 {approx = true} : vector<1x256xf32> -> vector<1x256xf32>
    %21 = vector.broadcast %20 : vector<1x256xf32> to vector<16x256xf32>
    %22 = arith.mulf %17, %21 : vector<16x256xf32>
    %23 = arith.truncf %22 : vector<16x256xf32> to vector<16x256xbf16>
    %cst_14 = arith.constant dense<0.000000e+00> : vector<32x256xf32>
    %24 = tpu.matmul %0, %23, %cst_14 {dimension_numbers = #tpu.dot_dimension_numbers<[0], [0], [1], [1], [0, 1, 1, 1], [], []>} : vector<16x32xbf16>, vector<16x256xbf16>, vector<32x256xf32> -> vector<32x256xf32>
    %25 = arith.addf %10, %24 : vector<32x256xf32>
    %c0_15 = arith.constant 0 : index
    %c0_16 = arith.constant 0 : index
    %c0_17 = arith.constant 0 : index
    %26 = vector.load %arg6[%c0_15, %c0_16, %c0_17] : memref<6x32x32xbf16, #tpu.memory_space<vmem>>, vector<1x32x32xbf16>
    %27 = vector.shape_cast %26 : vector<1x32x32xbf16> to vector<32x32xbf16>
    %c1 = arith.constant 1 : index
    %c0_18 = arith.constant 0 : index
    %c0_19 = arith.constant 0 : index
    %28 = vector.load %arg7[%c1, %c0_18, %c0_19] : memref<7x32x1xf32, #tpu.memory_space<vmem>>, vector<1x32x1xf32>
    %29 = vector.shape_cast %28 : vector<1x32x1xf32> to vector<32x1xf32>
    %30 = arith.truncf %25 : vector<32x256xf32> to vector<32x256xbf16>
    %cst_20 = arith.constant dense<0.000000e+00> : vector<32x256xf32>
    %31 = tpu.matmul %27, %30, %cst_20 {dimension_numbers = #tpu.dot_dimension_numbers<[0], [0], [1], [1], [0, 1, 1, 1], [], []>} : vector<32x32xbf16>, vector<32x256xbf16>, vector<32x256xf32> -> vector<32x256xf32>
    %32 = vector.broadcast %29 : vector<32x1xf32> to vector<32x256xf32>
    %33 = arith.addf %31, %32 : vector<32x256xf32>
    %c1_21 = arith.constant 1 : index
    %c0_22 = arith.constant 0 : index
    %c0_23 = arith.constant 0 : index
    %34 = vector.load %arg6[%c1_21, %c0_22, %c0_23] : memref<6x32x32xbf16, #tpu.memory_space<vmem>>, vector<1x32x32xbf16>
    %35 = vector.shape_cast %34 : vector<1x32x32xbf16> to vector<32x32xbf16>
    %c2 = arith.constant 2 : index
    %c0_24 = arith.constant 0 : index
    %c0_25 = arith.constant 0 : index
    %36 = vector.load %arg7[%c2, %c0_24, %c0_25] : memref<7x32x1xf32, #tpu.memory_space<vmem>>, vector<1x32x1xf32>
    %37 = vector.shape_cast %36 : vector<1x32x1xf32> to vector<32x1xf32>
    %38 = arith.truncf %33 : vector<32x256xf32> to vector<32x256xbf16>
    %cst_26 = arith.constant dense<0.000000e+00> : vector<32x256xf32>
    %39 = tpu.matmul %35, %38, %cst_26 {dimension_numbers = #tpu.dot_dimension_numbers<[0], [0], [1], [1], [0, 1, 1, 1], [], []>} : vector<32x32xbf16>, vector<32x256xbf16>, vector<32x256xf32> -> vector<32x256xf32>
    %40 = vector.broadcast %37 : vector<32x1xf32> to vector<32x256xf32>
    %41 = arith.addf %39, %40 : vector<32x256xf32>
    %42 = arith.truncf %41 : vector<32x256xf32> to vector<32x256xbf16>
    %cst_27 = arith.constant dense<0.000000e+00> : vector<16x256xf32>
    %43 = tpu.matmul %1, %42, %cst_27 {dimension_numbers = #tpu.dot_dimension_numbers<[1], [0], [0], [1], [0, 0, 1, 1], [], []>} : vector<16x32xbf16>, vector<32x256xbf16>, vector<16x256xf32> -> vector<16x256xf32>
    %cst_28 = arith.constant dense<0xFF800000> : vector<256xf32>
    %44 = vector.multi_reduction <maximumf>, %43, %cst_28 [0] : vector<16x256xf32> to vector<256xf32>
    %45 = vector.shape_cast %44 : vector<256xf32> to vector<1x256xf32>
    %46 = vector.broadcast %45 : vector<1x256xf32> to vector<16x256xf32>
    %47 = arith.subf %43, %46 : vector<16x256xf32>
    %48 = math.exp %47 : vector<16x256xf32>
    %cst_29 = arith.constant dense<0.000000e+00> : vector<256xf32>
    %49 = vector.multi_reduction <add>, %48, %cst_29 [0] : vector<16x256xf32> to vector<256xf32>
    %50 = vector.shape_cast %49 : vector<256xf32> to vector<1x256xf32>
    %51 = tpu.reciprocal %50 {approx = true} : vector<1x256xf32> -> vector<1x256xf32>
    %52 = vector.broadcast %51 : vector<1x256xf32> to vector<16x256xf32>
    %53 = arith.mulf %48, %52 : vector<16x256xf32>
    %54 = arith.truncf %53 : vector<16x256xf32> to vector<16x256xbf16>
    %cst_30 = arith.constant dense<0.000000e+00> : vector<32x256xf32>
    %55 = tpu.matmul %0, %54, %cst_30 {dimension_numbers = #tpu.dot_dimension_numbers<[0], [0], [1], [1], [0, 1, 1, 1], [], []>} : vector<16x32xbf16>, vector<16x256xbf16>, vector<32x256xf32> -> vector<32x256xf32>
    %56 = arith.addf %41, %55 : vector<32x256xf32>
    %c2_31 = arith.constant 2 : index
    %c0_32 = arith.constant 0 : index
    %c0_33 = arith.constant 0 : index
    %57 = vector.load %arg6[%c2_31, %c0_32, %c0_33] : memref<6x32x32xbf16, #tpu.memory_space<vmem>>, vector<1x32x32xbf16>
    %58 = vector.shape_cast %57 : vector<1x32x32xbf16> to vector<32x32xbf16>
    %c3 = arith.constant 3 : index
    %c0_34 = arith.constant 0 : index
    %c0_35 = arith.constant 0 : index
    %59 = vector.load %arg7[%c3, %c0_34, %c0_35] : memref<7x32x1xf32, #tpu.memory_space<vmem>>, vector<1x32x1xf32>
    %60 = vector.shape_cast %59 : vector<1x32x1xf32> to vector<32x1xf32>
    %61 = arith.truncf %56 : vector<32x256xf32> to vector<32x256xbf16>
    %cst_36 = arith.constant dense<0.000000e+00> : vector<32x256xf32>
    %62 = tpu.matmul %58, %61, %cst_36 {dimension_numbers = #tpu.dot_dimension_numbers<[0], [0], [1], [1], [0, 1, 1, 1], [], []>} : vector<32x32xbf16>, vector<32x256xbf16>, vector<32x256xf32> -> vector<32x256xf32>
    %63 = vector.broadcast %60 : vector<32x1xf32> to vector<32x256xf32>
    %64 = arith.addf %62, %63 : vector<32x256xf32>
    %c3_37 = arith.constant 3 : index
    %c0_38 = arith.constant 0 : index
    %c0_39 = arith.constant 0 : index
    %65 = vector.load %arg6[%c3_37, %c0_38, %c0_39] : memref<6x32x32xbf16, #tpu.memory_space<vmem>>, vector<1x32x32xbf16>
    %66 = vector.shape_cast %65 : vector<1x32x32xbf16> to vector<32x32xbf16>
    %c4 = arith.constant 4 : index
    %c0_40 = arith.constant 0 : index
    %c0_41 = arith.constant 0 : index
    %67 = vector.load %arg7[%c4, %c0_40, %c0_41] : memref<7x32x1xf32, #tpu.memory_space<vmem>>, vector<1x32x1xf32>
    %68 = vector.shape_cast %67 : vector<1x32x1xf32> to vector<32x1xf32>
    %69 = arith.truncf %64 : vector<32x256xf32> to vector<32x256xbf16>
    %cst_42 = arith.constant dense<0.000000e+00> : vector<32x256xf32>
    %70 = tpu.matmul %66, %69, %cst_42 {dimension_numbers = #tpu.dot_dimension_numbers<[0], [0], [1], [1], [0, 1, 1, 1], [], []>} : vector<32x32xbf16>, vector<32x256xbf16>, vector<32x256xf32> -> vector<32x256xf32>
    %71 = vector.broadcast %68 : vector<32x1xf32> to vector<32x256xf32>
    %72 = arith.addf %70, %71 : vector<32x256xf32>
    %73 = arith.truncf %72 : vector<32x256xf32> to vector<32x256xbf16>
    %cst_43 = arith.constant dense<0.000000e+00> : vector<16x256xf32>
    %74 = tpu.matmul %1, %73, %cst_43 {dimension_numbers = #tpu.dot_dimension_numbers<[1], [0], [0], [1], [0, 0, 1, 1], [], []>} : vector<16x32xbf16>, vector<32x256xbf16>, vector<16x256xf32> -> vector<16x256xf32>
    %cst_44 = arith.constant dense<0xFF800000> : vector<256xf32>
    %75 = vector.multi_reduction <maximumf>, %74, %cst_44 [0] : vector<16x256xf32> to vector<256xf32>
    %76 = vector.shape_cast %75 : vector<256xf32> to vector<1x256xf32>
    %77 = vector.broadcast %76 : vector<1x256xf32> to vector<16x256xf32>
    %78 = arith.subf %74, %77 : vector<16x256xf32>
    %79 = math.exp %78 : vector<16x256xf32>
    %cst_45 = arith.constant dense<0.000000e+00> : vector<256xf32>
    %80 = vector.multi_reduction <add>, %79, %cst_45 [0] : vector<16x256xf32> to vector<256xf32>
    %81 = vector.shape_cast %80 : vector<256xf32> to vector<1x256xf32>
    %82 = tpu.reciprocal %81 {approx = true} : vector<1x256xf32> -> vector<1x256xf32>
    %83 = vector.broadcast %82 : vector<1x256xf32> to vector<16x256xf32>
    %84 = arith.mulf %79, %83 : vector<16x256xf32>
    %85 = arith.truncf %84 : vector<16x256xf32> to vector<16x256xbf16>
    %cst_46 = arith.constant dense<0.000000e+00> : vector<32x256xf32>
    %86 = tpu.matmul %0, %85, %cst_46 {dimension_numbers = #tpu.dot_dimension_numbers<[0], [0], [1], [1], [0, 1, 1, 1], [], []>} : vector<16x32xbf16>, vector<16x256xbf16>, vector<32x256xf32> -> vector<32x256xf32>
    %87 = arith.addf %72, %86 : vector<32x256xf32>
    %c4_47 = arith.constant 4 : index
    %c0_48 = arith.constant 0 : index
    %c0_49 = arith.constant 0 : index
    %88 = vector.load %arg6[%c4_47, %c0_48, %c0_49] : memref<6x32x32xbf16, #tpu.memory_space<vmem>>, vector<1x32x32xbf16>
    %89 = vector.shape_cast %88 : vector<1x32x32xbf16> to vector<32x32xbf16>
    %c5 = arith.constant 5 : index
    %c0_50 = arith.constant 0 : index
    %c0_51 = arith.constant 0 : index
    %90 = vector.load %arg7[%c5, %c0_50, %c0_51] : memref<7x32x1xf32, #tpu.memory_space<vmem>>, vector<1x32x1xf32>
    %91 = vector.shape_cast %90 : vector<1x32x1xf32> to vector<32x1xf32>
    %92 = arith.truncf %87 : vector<32x256xf32> to vector<32x256xbf16>
    %cst_52 = arith.constant dense<0.000000e+00> : vector<32x256xf32>
    %93 = tpu.matmul %89, %92, %cst_52 {dimension_numbers = #tpu.dot_dimension_numbers<[0], [0], [1], [1], [0, 1, 1, 1], [], []>} : vector<32x32xbf16>, vector<32x256xbf16>, vector<32x256xf32> -> vector<32x256xf32>
    %94 = vector.broadcast %91 : vector<32x1xf32> to vector<32x256xf32>
    %95 = arith.addf %93, %94 : vector<32x256xf32>
    %c5_53 = arith.constant 5 : index
    %c0_54 = arith.constant 0 : index
    %c0_55 = arith.constant 0 : index
    %96 = vector.load %arg6[%c5_53, %c0_54, %c0_55] : memref<6x32x32xbf16, #tpu.memory_space<vmem>>, vector<1x32x32xbf16>
    %97 = vector.shape_cast %96 : vector<1x32x32xbf16> to vector<32x32xbf16>
    %c6 = arith.constant 6 : index
    %c0_56 = arith.constant 0 : index
    %c0_57 = arith.constant 0 : index
    %98 = vector.load %arg7[%c6, %c0_56, %c0_57] : memref<7x32x1xf32, #tpu.memory_space<vmem>>, vector<1x32x1xf32>
    %99 = vector.shape_cast %98 : vector<1x32x1xf32> to vector<32x1xf32>
    %100 = arith.truncf %95 : vector<32x256xf32> to vector<32x256xbf16>
    %cst_58 = arith.constant dense<0.000000e+00> : vector<32x256xf32>
    %101 = tpu.matmul %97, %100, %cst_58 {dimension_numbers = #tpu.dot_dimension_numbers<[0], [0], [1], [1], [0, 1, 1, 1], [], []>} : vector<32x32xbf16>, vector<32x256xbf16>, vector<32x256xf32> -> vector<32x256xf32>
    %102 = vector.broadcast %99 : vector<32x1xf32> to vector<32x256xf32>
    %103 = arith.addf %101, %102 : vector<32x256xf32>
    %104 = arith.truncf %103 : vector<32x256xf32> to vector<32x256xbf16>
    %cst_59 = arith.constant dense<0.000000e+00> : vector<16x256xf32>
    %105 = tpu.matmul %1, %104, %cst_59 {dimension_numbers = #tpu.dot_dimension_numbers<[1], [0], [0], [1], [0, 0, 1, 1], [], []>} : vector<16x32xbf16>, vector<32x256xbf16>, vector<16x256xf32> -> vector<16x256xf32>
    %cst_60 = arith.constant dense<0xFF800000> : vector<256xf32>
    %106 = vector.multi_reduction <maximumf>, %105, %cst_60 [0] : vector<16x256xf32> to vector<256xf32>
    %107 = vector.shape_cast %106 : vector<256xf32> to vector<1x256xf32>
    %108 = vector.broadcast %107 : vector<1x256xf32> to vector<16x256xf32>
    %109 = arith.subf %105, %108 : vector<16x256xf32>
    %110 = math.exp %109 : vector<16x256xf32>
    %cst_61 = arith.constant dense<0.000000e+00> : vector<256xf32>
    %111 = vector.multi_reduction <add>, %110, %cst_61 [0] : vector<16x256xf32> to vector<256xf32>
    %112 = vector.shape_cast %111 : vector<256xf32> to vector<1x256xf32>
    %113 = tpu.reciprocal %112 {approx = true} : vector<1x256xf32> -> vector<1x256xf32>
    %114 = vector.broadcast %113 : vector<1x256xf32> to vector<16x256xf32>
    %115 = arith.mulf %110, %114 : vector<16x256xf32>
    %116 = arith.truncf %115 : vector<16x256xf32> to vector<16x256xbf16>
    %cst_62 = arith.constant dense<0.000000e+00> : vector<32x256xf32>
    %117 = tpu.matmul %0, %116, %cst_62 {dimension_numbers = #tpu.dot_dimension_numbers<[0], [0], [1], [1], [0, 1, 1, 1], [], []>} : vector<16x32xbf16>, vector<16x256xbf16>, vector<32x256xf32> -> vector<32x256xf32>
    %118 = arith.addf %103, %117 : vector<32x256xf32>
    %c0_63 = arith.constant 0 : index
    %c0_64 = arith.constant 0 : index
    %119 = vector.load %arg8[%c0_63, %c0_64] : memref<32x3xbf16, #tpu.memory_space<vmem>>, vector<32x3xbf16>
    %120 = arith.truncf %118 : vector<32x256xf32> to vector<32x256xbf16>
    %cst_65 = arith.constant dense<0.000000e+00> : vector<3x256xf32>
    %121 = tpu.matmul %119, %120, %cst_65 {dimension_numbers = #tpu.dot_dimension_numbers<[0], [0], [1], [1], [0, 1, 1, 1], [], []>} : vector<32x3xbf16>, vector<32x256xbf16>, vector<3x256xf32> -> vector<3x256xf32>
    %c0_66 = arith.constant 0 : index
    %c0_67 = arith.constant 0 : index
    %122 = vector.load %arg9[%c0_66, %c0_67] : memref<3x1xf32, #tpu.memory_space<vmem>>, vector<3x1xf32>
    %123 = vector.broadcast %122 : vector<3x1xf32> to vector<3x256xf32>
    %124 = arith.addf %121, %123 : vector<3x256xf32>
    %c0_68 = arith.constant 0 : index
    %c0_69 = arith.constant 0 : index
    %c0_70 = arith.constant 0 : index
    %125 = vector.load %arg10[%c0_68, %c0_69, %c0_70] : memref<1x3x256xf32, #tpu.memory_space<vmem>>, vector<1x3x256xf32>
    %126 = vector.shape_cast %125 : vector<1x3x256xf32> to vector<3x256xf32>
    %127 = vector.shape_cast %124 : vector<3x256xf32> to vector<1x3x256xf32>
    tpu.vector_store %arg10[%c0_68, %c0_69, %c0_70], %127 {strides = array<i32>} : memref<1x3x256xf32, #tpu.memory_space<vmem>>, vector<1x3x256xf32>,
    return
  }
  func.func @transform_0(%arg0: i32, %arg1: i32) -> (i32, i32, i32) {
    %c0_i32 = arith.constant 0 : i32
    %c0_i32_0 = arith.constant 0 : i32
    return %arg0, %c0_i32, %arg1 : i32, i32, i32
  }
  func.func @transform_1(%arg0: i32, %arg1: i32) -> (i32, i32) {
    %c0_i32 = arith.constant 0 : i32
    %c0_i32_0 = arith.constant 0 : i32
    %c0_i32_1 = arith.constant 0 : i32
    return %c0_i32, %c0_i32_0 : i32, i32
  }
  func.func @transform_2(%arg0: i32, %arg1: i32) -> (i32, i32) {
    %c0_i32 = arith.constant 0 : i32
    %c0_i32_0 = arith.constant 0 : i32
    %c0_i32_1 = arith.constant 0 : i32
    return %c0_i32, %c0_i32_0 : i32, i32
  }
  func.func @transform_3(%arg0: i32, %arg1: i32) -> (i32, i32) {
    %c0_i32 = arith.constant 0 : i32
    %c0_i32_0 = arith.constant 0 : i32
    %c0_i32_1 = arith.constant 0 : i32
    return %c0_i32, %c0_i32_0 : i32, i32
  }
  func.func @transform_4(%arg0: i32, %arg1: i32) -> (i32, i32, i32) {
    %c0_i32 = arith.constant 0 : i32
    %c0_i32_0 = arith.constant 0 : i32
    %c0_i32_1 = arith.constant 0 : i32
    %c0_i32_2 = arith.constant 0 : i32
    return %c0_i32, %c0_i32_0, %c0_i32_1 : i32, i32, i32
  }
  func.func @transform_5(%arg0: i32, %arg1: i32) -> (i32, i32, i32) {
    %c0_i32 = arith.constant 0 : i32
    %c0_i32_0 = arith.constant 0 : i32
    %c0_i32_1 = arith.constant 0 : i32
    %c0_i32_2 = arith.constant 0 : i32
    return %c0_i32, %c0_i32_0, %c0_i32_1 : i32, i32, i32
  }
  func.func @transform_6(%arg0: i32, %arg1: i32) -> (i32, i32) {
    %c0_i32 = arith.constant 0 : i32
    %c0_i32_0 = arith.constant 0 : i32
    %c0_i32_1 = arith.constant 0 : i32
    return %c0_i32, %c0_i32_0 : i32, i32
  }
  func.func @transform_7(%arg0: i32, %arg1: i32) -> (i32, i32) {
    %c0_i32 = arith.constant 0 : i32
    %c0_i32_0 = arith.constant 0 : i32
    %c0_i32_1 = arith.constant 0 : i32
    return %c0_i32, %c0_i32_0 : i32, i32
  }
  func.func @transform_8(%arg0: i32, %arg1: i32) -> (i32, i32, i32) {
    %c0_i32 = arith.constant 0 : i32
    %c0_i32_0 = arith.constant 0 : i32
    return %arg0, %c0_i32, %arg1 : i32, i32, i32
  }
}

</mosaic_0001>

<llo_original>
// kernel: only_pga_forward.1
$region0: #{only_pga_forward.1}
  #allocation0 [shape = 'u32[]', space=smem, size = 0x4, offset = 0x4, fixed_abs, tag = 'smem constant byte address 0x4 - core index']
  #allocation1 [shape = 'u32[144,128]{1,0:T(1,128)}', space=vmem, size = 0x12000, scoped, tag = 'internal scratch']
  %s0 = inlined_call_operand.vmem [shape: f32[2,4,256], index: 0, kind: input, shape index: {}]
  %s1 = inlined_call_operand.vmem [shape: bf16[16,32], index: 1, kind: input, shape index: {}]
  %s2 = inlined_call_operand.vmem [shape: bf16[16,32], index: 2, kind: input, shape index: {}]
  %s3 = inlined_call_operand.vmem [shape: bf16[4,32], index: 3, kind: input, shape index: {}]
  %s4 = inlined_call_operand.vmem [shape: bf16[6,32,32], index: 4, kind: input, shape index: {}]
  %s5 = inlined_call_operand.vmem [shape: f32[7,32,1], index: 5, kind: input, shape index: {}]
  %s6 = inlined_call_operand.vmem [shape: bf16[32,3], index: 6, kind: input, shape index: {}]
  %s7 = inlined_call_operand.vmem [shape: f32[3,1], index: 7, kind: input, shape index: {}]
  %s8 = inlined_call_operand.vmem [shape: f32[2,3,256], index: 8, kind: output, shape index: {}]
  %s9 = sld [smem:[#allocation0]]
  $region65: #{only_pga_forward.1} parent=0
    _
  %s11 = ssub.s32 1, %s9
  %s12 = scalar_select 0, %s11, %s9
  loop: start=0, step=1, limit=4
  $region2: #{only_pga_forward.1} parent=0 // loop_pre_header
    _
  $region3: #{only_pga_forward.1} parent=0 // loop_header
    %s14 = sphi 0, %s18
    %p15 = scmp.ge.s32.totalorder %s14, 4
    %s21 = sphi 0, %s33
    %s22 = sphi 0, %s29
    %s23 = sphi 0, %s21
    %s24 = sphi 0, %s22
    %s25 = sphi 0, %s23
    %s26 = sphi 0, %s24
    %s38 = sphi 0, %s40
    %s41 = sphi 0, %s38
    %s42 = sphi 0, %s41
    %s58 = sphi 0, %s42
    %s62 = sphi 0, %s62
    %s64 = sphi 0, %s62
    %s65 = sphi 0, %s64
    %s79 = sphi 0, %s65
    %s83 = sphi 0, %s83
    %s85 = sphi 0, %s83
    %s86 = sphi 0, %s85
    %s100 = sphi 0, %s86
    %s104 = sphi 0, %s104
    %s106 = sphi 0, %s104
    %s107 = sphi 0, %s106
    %s121 = sphi 0, %s107
    %s125 = sphi 0, %s125
    %s127 = sphi 0, %s125
    %s128 = sphi 0, %s127
    %s142 = sphi 0, %s128
    %s146 = sphi 0, %s146
    %s148 = sphi 0, %s146
    %s149 = sphi 0, %s148
    %s163 = sphi 0, %s149
    %s167 = sphi 0, %s167
    %s169 = sphi 0, %s167
    %s170 = sphi 0, %s169
    %s184 = sphi 0, %s170
    %s188 = sphi 0, %s188
    %s190 = sphi 0, %s188
    %s191 = sphi 0, %s190
    %s205 = sphi 0, %s191
    %s213 = sphi 0, %s215
    %s216 = sphi 0, %s213
    %s217 = sphi 0, %s216
    %s233 = sphi 0, %s217
  $region4: #{only_pga_forward.1} parent=0 // loop_header_branch
    %17 = sbr.rel (%p15) target = $region8
  $region5: #{only_pga_forward.1} parent=0 // loop_body
    %s19 = ssub.s32 %s14, 1
    %s20 = ssub.s32 %s14, 2
    %s27 = sadd.s32 1, %s22
    %p28 = scmp.ge.s32.totalorder %s27, 1
    %s29 = scalar_select %p28, 0, %s27
    %s30 = sadd.s32 1, %s21
    %s31 = scalar_select %p28, %s30, %s21
    %p32 = scmp.ge.s32.totalorder %s31, 2
    %s33 = scalar_select %p32, 0, %s31
    %s34 = ssub.s32 %s21, %s33
    %s35 = ssub.s32 %s22, %s29
    %s36 = sor.u32 %s34, %s35
    %p37 = scmp.eq.s32.totalorder %s36, 0
    %s39 = sadd.s32 %s38, 1
    %s40 = scalar_select %p37, %s38, %s39
    %p43 = pneg %p37
    %p44 = scmp.eq.s32.totalorder %s14, 1
    %p45 = por %p43, %p44
    %p46 = scmp.ne.s32.totalorder %s38, %s41
    %p47 = scmp.eq.s32.totalorder %s14, 0
    %p48 = por %p46, %p47
    %p49 = scmp.ne.s32.totalorder %s38, %s41
    %p50 = scmp.eq.s32.totalorder %s19, 1
    %p51 = por %p49, %p50
    %p52 = scmp.ne.s32.totalorder %s41, %s42
    %p53 = scmp.eq.s32.totalorder %s19, 0
    %p54 = por %p52, %p53
    %p55 = scmp.ne.s32.totalorder %s41, %s42
    %p56 = scmp.eq.s32.totalorder %s20, 1
    %p57 = por %p55, %p56
    %p59 = scmp.ne.s32.totalorder %s42, %s58
    %p60 = scmp.eq.s32.totalorder %s20, 0
    %p61 = por %p59, %p60
    %s63 = sadd.s32 %s62, 1
    %p66 = scmp.eq.s32.totalorder %s14, 1
    %p67 = scmp.ne.s32.totalorder %s62, %s64
    %p68 = scmp.eq.s32.totalorder %s14, 0
    %p69 = por %p67, %p68
    %p70 = scmp.ne.s32.totalorder %s62, %s64
    %p71 = scmp.eq.s32.totalorder %s19, 1
    %p72 = por %p70, %p71
    %p73 = scmp.ne.s32.totalorder %s64, %s65
    %p74 = scmp.eq.s32.totalorder %s19, 0
    %p75 = por %p73, %p74
    %p76 = scmp.ne.s32.totalorder %s64, %s65
    %p77 = scmp.eq.s32.totalorder %s20, 1
    %p78 = por %p76, %p77
    %p80 = scmp.ne.s32.totalorder %s65, %s79
    %p81 = scmp.eq.s32.totalorder %s20, 0
    %p82 = por %p80, %p81
    %s84 = sadd.s32 %s83, 1
    %p87 = scmp.eq.s32.totalorder %s14, 1
    %p88 = scmp.ne.s32.totalorder %s83, %s85
    %p89 = scmp.eq.s32.totalorder %s14, 0
    %p90 = por %p88, %p89
    %p91 = scmp.ne.s32.totalorder %s83, %s85
    %p92 = scmp.eq.s32.totalorder %s19, 1
    %p93 = por %p91, %p92
    %p94 = scmp.ne.s32.totalorder %s85, %s86
    %p95 = scmp.eq.s32.totalorder %s19, 0
    %p96 = por %p94, %p95
    %p97 = scmp.ne.s32.totalorder %s85, %s86
    %p98 = scmp.eq.s32.totalorder %s20, 1
    %p99 = por %p97, %p98
    %p101 = scmp.ne.s32.totalorder %s86, %s100
    %p102 = scmp.eq.s32.totalorder %s20, 0
    %p103 = por %p101, %p102
    %s105 = sadd.s32 %s104, 1
    %p108 = scmp.eq.s32.totalorder %s14, 1
    %p109 = scmp.ne.s32.totalorder %s104, %s106
    %p110 = scmp.eq.s32.totalorder %s14, 0
    %p111 = por %p109, %p110
    %p112 = scmp.ne.s32.totalorder %s104, %s106
    %p113 = scmp.eq.s32.totalorder %s19, 1
    %p114 = por %p112, %p113
    %p115 = scmp.ne.s32.totalorder %s106, %s107
    %p116 = scmp.eq.s32.totalorder %s19, 0
    %p117 = por %p115, %p116
    %p118 = scmp.ne.s32.totalorder %s106, %s107
    %p119 = scmp.eq.s32.totalorder %s20, 1
    %p120 = por %p118, %p119
    %p122 = scmp.ne.s32.totalorder %s107, %s121
    %p123 = scmp.eq.s32.totalorder %s20, 0
    %p124 = por %p122, %p123
    %s126 = sadd.s32 %s125, 1
    %p129 = scmp.eq.s32.totalorder %s14, 1
    %p130 = scmp.ne.s32.totalorder %s125, %s127
    %p131 = scmp.eq.s32.totalorder %s14, 0
    %p132 = por %p130, %p131
    %p133 = scmp.ne.s32.totalorder %s125, %s127
    %p134 = scmp.eq.s32.totalorder %s19, 1
    %p135 = por %p133, %p134
    %p136 = scmp.ne.s32.totalorder %s127, %s128
    %p137 = scmp.eq.s32.totalorder %s19, 0
    %p138 = por %p136, %p137
    %p139 = scmp.ne.s32.totalorder %s127, %s128
    %p140 = scmp.eq.s32.totalorder %s20, 1
    %p141 = por %p139, %p140
    %p143 = scmp.ne.s32.totalorder %s128, %s142
    %p144 = scmp.eq.s32.totalorder %s20, 0
    %p145 = por %p143, %p144
    %s147 = sadd.s32 %s146, 1
    %p150 = scmp.eq.s32.totalorder %s14, 1
    %p151 = scmp.ne.s32.totalorder %s146, %s148
    %p152 = scmp.eq.s32.totalorder %s14, 0
    %p153 = por %p151, %p152
    %p154 = scmp.ne.s32.totalorder %s146, %s148
    %p155 = scmp.eq.s32.totalorder %s19, 1
    %p156 = por %p154, %p155
    %p157 = scmp.ne.s32.totalorder %s148, %s149
    %p158 = scmp.eq.s32.totalorder %s19, 0
    %p159 = por %p157, %p158
    %p160 = scmp.ne.s32.totalorder %s148, %s149
    %p161 = scmp.eq.s32.totalorder %s20, 1
    %p162 = por %p160, %p161
    %p164 = scmp.ne.s32.totalorder %s149, %s163
    %p165 = scmp.eq.s32.totalorder %s20, 0
    %p166 = por %p164, %p165
    %s168 = sadd.s32 %s167, 1
    %p171 = scmp.eq.s32.totalorder %s14, 1
    %p172 = scmp.ne.s32.totalorder %s167, %s169
    %p173 = scmp.eq.s32.totalorder %s14, 0
    %p174 = por %p172, %p173
    %p175 = scmp.ne.s32.totalorder %s167, %s169
    %p176 = scmp.eq.s32.totalorder %s19, 1
    %p177 = por %p175, %p176
    %p178 = scmp.ne.s32.totalorder %s169, %s170
    %p179 = scmp.eq.s32.totalorder %s19, 0
    %p180 = por %p178, %p179
    %p181 = scmp.ne.s32.totalorder %s169, %s170
    %p182 = scmp.eq.s32.totalorder %s20, 1
    %p183 = por %p181, %p182
    %p185 = scmp.ne.s32.totalorder %s170, %s184
    %p186 = scmp.eq.s32.totalorder %s20, 0
    %p187 = por %p185, %p186
    %s189 = sadd.s32 %s188, 1
    %p192 = scmp.eq.s32.totalorder %s14, 1
    %p193 = scmp.ne.s32.totalorder %s188, %s190
    %p194 = scmp.eq.s32.totalorder %s14, 0
    %p195 = por %p193, %p194
    %p196 = scmp.ne.s32.totalorder %s188, %s190
    %p197 = scmp.eq.s32.totalorder %s19, 1
    %p198 = por %p196, %p197
    %p199 = scmp.ne.s32.totalorder %s190, %s191
    %p200 = scmp.eq.s32.totalorder %s19, 0
    %p201 = por %p199, %p200
    %p202 = scmp.ne.s32.totalorder %s190, %s191
    %p203 = scmp.eq.s32.totalorder %s20, 1
    %p204 = por %p202, %p203
    %p206 = scmp.ne.s32.totalorder %s191, %s205
    %p207 = scmp.eq.s32.totalorder %s20, 0
    %p208 = por %p206, %p207
    %s209 = ssub.s32 %s21, %s33
    %s210 = ssub.s32 %s22, %s29
    %s211 = sor.u32 %s209, %s210
    %p212 = scmp.eq.s32.totalorder %s211, 0
    %s214 = sadd.s32 %s213, 1
    %s215 = scalar_select %p212, %s213, %s214
    %p218 = pneg %p212
    %p219 = scmp.eq.s32.totalorder %s14, 1
    %p220 = por %p218, %p219
    %p221 = scmp.ne.s32.totalorder %s213, %s216
    %p222 = scmp.eq.s32.totalorder %s14, 0
    %p223 = por %p221, %p222
    %p224 = scmp.ne.s32.totalorder %s213, %s216
    %p225 = scmp.eq.s32.totalorder %s19, 1
    %p226 = por %p224, %p225
    %p227 = scmp.ne.s32.totalorder %s216, %s217
    %p228 = scmp.eq.s32.totalorder %s19, 0
    %p229 = por %p227, %p228
    %p230 = scmp.ne.s32.totalorder %s216, %s217
    %p231 = scmp.eq.s32.totalorder %s20, 1
    %p232 = por %p230, %p231
    %p234 = scmp.ne.s32.totalorder %s217, %s233
    %p235 = scmp.eq.s32.totalorder %s20, 0
    %p236 = por %p234, %p235
    %p237 = scmp.le.s32.totalorder 1, %s14
    %p238 = scmp.lt.s32.totalorder %s14, 3
    %p239 = pnand %p237, %p238
    %p240 = pneg %p239
    // Predicated region
    $region9: #{only_pga_forward.1} parent=5 // pred_check
      _
    $region10: #{only_pga_forward.1} parent=5 // pred_check_branch
      %242 = sbr.rel (%p239) target = $region12
    $region11: #{only_pga_forward.1} parent=5 // pred_region
      %s243 = ssub.s32 %s14, 1
      // Predicated region
      $region13: #{only_pga_forward.1} parent=11 // pred_check
        %p244 = pneg %p75
      $region14: #{only_pga_forward.1} parent=11 // pred_check_branch
        %246 = sbr.rel (%p244) target = $region16
      $region15: #{only_pga_forward.1} parent=11 // pred_region
        _
      $region16: #{only_pga_forward.1} parent=11 // pred_fallthru
        _
      // Predicated region
      $region17: #{only_pga_forward.1} parent=11 // pred_check
        %p247 = pneg %p96
      $region18: #{only_pga_forward.1} parent=11 // pred_check_branch
        %249 = sbr.rel (%p247) target = $region20
      $region19: #{only_pga_forward.1} parent=11 // pred_region
        _
      $region20: #{only_pga_forward.1} parent=11 // pred_fallthru
        _
      // Predicated region
      $region21: #{only_pga_forward.1} parent=11 // pred_check
        %p250 = pneg %p117
      $region22: #{only_pga_forward.1} parent=11 // pred_check_branch
        %252 = sbr.rel (%p250) target = $region24
      $region23: #{only_pga_forward.1} parent=11 // pred_region
        _
      $region24: #{only_pga_forward.1} parent=11 // pred_fallthru
        _
      // Predicated region
      $region25: #{only_pga_forward.1} parent=11 // pred_check
        %p253 = pneg %p138
      $region26: #{only_pga_forward.1} parent=11 // pred_check_branch
        %255 = sbr.rel (%p253) target = $region28
      $region27: #{only_pga_forward.1} parent=11 // pred_region
        _
      $region28: #{only_pga_forward.1} parent=11 // pred_fallthru
        _
      // Predicated region
      $region29: #{only_pga_forward.1} parent=11 // pred_check
        %p256 = pneg %p159
      $region30: #{only_pga_forward.1} parent=11 // pred_check_branch
        %258 = sbr.rel (%p256) target = $region32
      $region31: #{only_pga_forward.1} parent=11 // pred_region
        _
      $region32: #{only_pga_forward.1} parent=11 // pred_fallthru
        _
      // Predicated region
      $region33: #{only_pga_forward.1} parent=11 // pred_check
        %p259 = pneg %p180
      $region34: #{only_pga_forward.1} parent=11 // pred_check_branch
        %261 = sbr.rel (%p259) target = $region36
      $region35: #{only_pga_forward.1} parent=11 // pred_region
        _
      $region36: #{only_pga_forward.1} parent=11 // pred_fallthru
        _
      // Predicated region
      $region37: #{only_pga_forward.1} parent=11 // pred_check
        %p262 = pneg %p201
      $region38: #{only_pga_forward.1} parent=11 // pred_check_branch
        %264 = sbr.rel (%p262) target = $region40
      $region39: #{only_pga_forward.1} parent=11 // pred_region
        _
      $region40: #{only_pga_forward.1} parent=11 // pred_fallthru
        _
    $region12: #{only_pga_forward.1} parent=5 // pred_fallthru
      _
    %p265 = scmp.lt.s32.totalorder %s14, 2
    // Predicated region
    $region41: #{only_pga_forward.1} parent=5 // pred_check
      %p266 = pneg %p265
    $region42: #{only_pga_forward.1} parent=5 // pred_check_branch
      %268 = sbr.rel (%p266) target = $region44
    $region43: #{only_pga_forward.1} parent=5 // pred_region
      // Predicated region
      $region45: #{only_pga_forward.1} parent=43 // pred_check
        %p269 = pneg %p48
      $region46: #{only_pga_forward.1} parent=43 // pred_check_branch
        %271 = sbr.rel (%p269) target = $region48
      $region47: #{only_pga_forward.1} parent=43 // pred_region
        %s272 = smul.u32 2, %s22
        %p273 = scmp.lt.s32.totalorder %s21, 1
        %s274 = scalar_select %p273, %s21, 1
        %p275 = scmp.lt.s32.totalorder %s272, 1
        %s276 = scalar_select %p275, %s272, 1
        %s277 = smul.addr %s274, 2
        %s278 = sadd.s32 %s276, %s277
        %s279 = smul.addr %s278, 4
        %s280 = scalar_lea.vmem %s0, %s279
        %s281 = smul.u32 2, %s22
      $region48: #{only_pga_forward.1} parent=43 // pred_fallthru
        _
    $region44: #{only_pga_forward.1} parent=5 // pred_fallthru
      _
    %p282 = scmp.le.s32.totalorder 1, %s14
    %p283 = scmp.lt.s32.totalorder %s14, 3
    %p284 = pnand %p282, %p283
    %p285 = pneg %p284
    // Predicated region
    $region49: #{only_pga_forward.1} parent=5 // pred_check
      _
    $region50: #{only_pga_forward.1} parent=5 // pred_check_branch
      %287 = sbr.rel (%p284) target = $region52
    $region51: #{only_pga_forward.1} parent=5 // pred_region
      %s288 = ssub.s32 %s14, 1
      %s289 = smul.u32 2, %s24
      %p290 = scmp.lt.s32.totalorder %s23, 1
      %s291 = scalar_select %p290, %s23, 1
      %p292 = scmp.lt.s32.totalorder %s289, 1
      %s293 = scalar_select %p292, %s289, 1
      %s294 = smul.addr %s291, 2
      %s295 = sadd.s32 %s293, %s294
      %s296 = smul.addr %s295, 4
      %s297 = scalar_lea.vmem %s0, %s296
      %p298 = pneg %p54
      %p299 = pneg %p51
      %p300 = pneg %p75
      %p301 = pneg %p72
      %p302 = pneg %p96
      %p303 = pneg %p93
      %p304 = pneg %p117
      %p305 = pneg %p114
      %p306 = pneg %p138
      %p307 = pneg %p135
      %p308 = pneg %p159
      %p309 = pneg %p156
      %p310 = pneg %p180
      %p311 = pneg %p177
      %p312 = pneg %p201
      %p313 = pneg %p198
      %p314 = pneg %p229
      %p315 = pneg %p226
      %s316 = smul.u32 2, %s24
      %p317 = scmp.lt.s32.totalorder %s23, 1
      %s318 = scalar_select %p317, %s23, 1
      %p319 = scmp.lt.s32.totalorder %s316, 1
      %s320 = scalar_select %p319, %s316, 1
      %s321 = smul.addr %s318, 2
      %s322 = sadd.s32 %s320, %s321
      %s323 = smul.addr %s322, 4
      %s324 = scalar_lea.vmem %s8, %s323
      %s325 = smul.u32 2, %s24
      %p326 = scmp.lt.s32.totalorder %s23, 1
      %s327 = scalar_select %p326, %s23, 1
      %p328 = scmp.lt.s32.totalorder %s325, 1
      %s329 = scalar_select %p328, %s325, 1
      %s330 = smul.addr %s327, 2
      %s331 = sadd.s32 %s329, %s330
      %s332 = smul.addr %s331, 4
      %s333 = scalar_lea.vmem %s0, %s332
      %s334 = smul.u32 2, %s24
      %s335 = smul.u32 2, %s24
      %p336 = scmp.lt.s32.totalorder %s23, 1
      %s337 = scalar_select %p336, %s23, 1
      %p338 = scmp.lt.s32.totalorder %s335, 1
      %s339 = scalar_select %p338, %s335, 1
      %s340 = smul.addr %s337, 2
      %s341 = sadd.s32 %s339, %s340
      %s342 = smul.addr %s341, 4
      %s343 = scalar_lea.vmem %s8, %s342
      %s344 = smul.u32 2, %s24
      %v346 = vld [vmem:[%s1] sm:$0xf]
      %v347 = vld [vmem:[%s1 + $0x4] sm:$0xf]
      %v348 = vld [vmem:[%s2] sm:$0xf]
      %v349 = vld [vmem:[%s2 + $0x4] sm:$0xf]
      %v350 = vld [vmem:[%s333] sm:$0xff]
      %v351 = vld [vmem:[%s3] sm:$0x3]
      %v352 = vld [vmem:[%s5] sm:$0xff]
      %v353 = vld [vmem:[%s5 + $0x8] sm:$0xff]
      %v354 = vld [vmem:[%s5 + $0x10] sm:$0xff]
      %v355 = vld [vmem:[%s5 + $0x18] sm:$0xff]
      %v357 = vcombine.high %v350, %v350
      %v359 = vpack.c.bf16 %v350, %v350
      %v360 = vpack.c.bf16 %v357, %v357
      %362 = vset.pattern.permute.xlu0 0
      %363 = vperm.xlu0 %362, %v352
      %v364 = vpop.permute.xlu0 %363
      %367 = vset.pattern.permute.xlu0 0
      %368 = vperm.xlu0 %367, %v353
      %v369 = vpop.permute.xlu0 %368
      %372 = vset.pattern.permute.xlu0 0
      %373 = vperm.xlu0 %372, %v354
      %v374 = vpop.permute.xlu0 %373
      %377 = vset.pattern.permute.xlu0 0
      %378 = vperm.xlu0 %377, %v355
      %v379 = vpop.permute.xlu0 %378
      %381 = vxpose.xlu0.c.b16.start [1/8] %v351, 128
      %382 = vxpose.xlu0.c.b16.cont [2/8] 0, 128
      %383 = vxpose.xlu0.c.b16.cont [3/8] 0, 128
      %384 = vxpose.xlu0.c.b16.cont [4/8] 0, 128
      %385 = vxpose.xlu0.c.b16.cont [5/8] 0, 128
      %386 = vxpose.xlu0.c.b16.cont [6/8] 0, 128
      %387 = vxpose.xlu0.c.b16.cont [7/8] 0, 128
      %388 = vxpose.xlu0.c.b16.end [8/8] 0, 128
      %v389 = vpop.trf.xlu0
      %v390 = vpop.trf.xlu0
      %v391 = vpop.trf.xlu0
      %v392 = vpop.trf.xlu0
      %v393 = vpop.trf.xlu0
      %v394 = vpop.trf.xlu0
      %v395 = vpop.trf.xlu0
      %v396 = vpop.trf.xlu0
      %vm397 = vcmask 31744
      %v399 = vsel %vm397, %v389, 0
      %v402 = vsel %vm397, %v390, 0
      %vm404 = vcmask 1041408
      %v406 = vsel %vm404, %v359, 0
      %v409 = vsel %vm404, %v360, 0
      %411 = vmatprep.subr.bf16.mxu0 0
      %412 = vmatpush1.bf16.msra.mxu0 0
      %413 = vmatprep.subr.bf16.mxu0 0
      %414 = vmatpush1.bf16.msra.mxu0 0
      %415 = vmatprep.subr.bf16.mxu0 0
      %416 = vmatpush1.bf16.msra.mxu0 0
      %417 = vmatprep.subr.bf16.mxu0 0
      %418 = vmatpush1.bf16.msra.mxu0 0
      %419 = vmatprep.subr.bf16.mxu0 0
      %420 = vmatpush1.bf16.msra.mxu0 0
      %421 = vmatprep.subr.bf16.mxu0 0
      %422 = vmatpush1.bf16.msra.mxu0 0
      %423 = vmatprep.subr.bf16.mxu0 0
      %424 = vmatpush1.bf16.msra.mxu0 0
      %425 = vmatprep.subr.bf16.mxu0 %v409
      %426 = vmatpush1.bf16.msra.mxu0 %v406
      %427 = vmatprep.subr.bf16.mxu0 0
      %428 = vmatpush2.bf16.msra.mxu0 0
      %429 = vmatprep.subr.bf16.mxu0 0
      %430 = vmatpush2.bf16.msra.mxu0 0
      %431 = vmatprep.subr.bf16.mxu0 0
      %432 = vmatpush2.bf16.msra.mxu0 0
      %433 = vmatprep.subr.bf16.mxu0 0
      %434 = vmatpush2.bf16.msra.mxu0 0
      %435 = vmatprep.subr.bf16.mxu0 0
      %436 = vmatpush2.bf16.msra.mxu0 0
      %437 = vmatprep.subr.bf16.mxu0 0
      %438 = vmatpush2.bf16.msra.mxu0 0
      %439 = vmatprep.subr.bf16.mxu0 0
      %440 = vmatpush2.bf16.msra.mxu0 0
      %441 = vmatprep.subr.bf16.mxu0 0
      %442 = vmatpush2.bf16.msra.mxu0 0
      %443 = vmatprep.mubr.bf16.mxu0 0
      %444 = vmatmul.mubr.bf16.gmra.mxu0 %v399
      %v445 = vpop.f32.mrf.mxu0
      %v446 = vadd.f32 %v364, %v445
      %v447 = vpop.f32.mrf.mxu0
      %v448 = vadd.f32 %v364, %v447
      %v449 = vpop.f32.mrf.mxu0
      %v450 = vadd.f32 %v369, %v449
      %v451 = vpop.f32.mrf.mxu0
      %v452 = vadd.f32 %v369, %v451
      %453 = vmatprep.mubr.bf16.mxu0 0
      %454 = vmatmul.mubr.bf16.gmra.mxu0 %v402
      %v455 = vpop.f32.mrf.mxu0
      %v456 = vadd.f32 %v374, %v455
      %v457 = vpop.f32.mrf.mxu0
      %v458 = vadd.f32 %v374, %v457
      %v459 = vpop.f32.mrf.mxu0
      %v460 = vadd.f32 %v379, %v459
      %v461 = vpop.f32.mrf.mxu0
      %v462 = vadd.f32 %v379, %v461
      %463 = vdwg.mxu0
      %v464 = vpack.c.bf16 %v450, %v446
      %v465 = vpack.c.bf16 %v452, %v448
      %v466 = vpack.c.bf16 %v460, %v456
      %v467 = vpack.c.bf16 %v462, %v458
      %v470 = vunpack.c.l.b16 %v348
      %v471 = vunpack.c.l.b16 %v349
      %v472 = vpack.c.b16 %v471, %v470
      %vm473 = vcmask 261120
      %v475 = vsel %vm473, %v472, 0
      %477 = vmatprep.subr.bf16.mxu0 0
      %478 = vmatpush1.bf16.msra.mxu0 0
      %479 = vmatprep.subr.bf16.mxu0 0
      %480 = vmatpush1.bf16.msra.mxu0 0
      %481 = vmatprep.subr.bf16.mxu0 0
      %482 = vmatpush1.bf16.msra.mxu0 0
      %483 = vmatprep.subr.bf16.mxu0 0
      %484 = vmatpush1.bf16.msra.mxu0 0
      %485 = vmatprep.subr.bf16.mxu0 0
      %486 = vmatpush1.bf16.msra.mxu0 0
      %487 = vmatprep.subr.bf16.mxu0 0
      %488 = vmatpush1.bf16.msra.mxu0 0
      %489 = vmatprep.subr.bf16.mxu0 %v467
      %490 = vmatpush1.bf16.msra.mxu0 %v466
      %491 = vmatprep.subr.bf16.mxu0 %v465
      %492 = vmatpush1.bf16.msra.mxu0 %v464
      %493 = vmatprep.subr.bf16.mxu0 0
      %494 = vmatpush2.bf16.msra.mxu0 0
      %495 = vmatprep.subr.bf16.mxu0 0
      %496 = vmatpush2.bf16.msra.mxu0 0
      %497 = vmatprep.subr.bf16.mxu0 0
      %498 = vmatpush2.bf16.msra.mxu0 0
      %499 = vmatprep.subr.bf16.mxu0 0
      %500 = vmatpush2.bf16.msra.mxu0 0
      %501 = vmatprep.subr.bf16.mxu0 0
      %502 = vmatpush2.bf16.msra.mxu0 0
      %503 = vmatprep.subr.bf16.mxu0 0
      %504 = vmatpush2.bf16.msra.mxu0 0
      %505 = vmatprep.subr.bf16.mxu0 0
      %506 = vmatpush2.bf16.msra.mxu0 0
      %507 = vmatprep.subr.bf16.mxu0 0
      %508 = vmatpush2.bf16.msra.mxu0 0
      %509 = vmatprep.mubr.bf16.mxu0 0
      %510 = vmatmul.mubr.bf16.gmra.mxu0 %v475
      %v511 = vpop.f32.mrf.mxu0
      %v512 = vadd.f32 0.0, %v511
      %v513 = vpop.f32.mrf.mxu0
      %v514 = vadd.f32 0.0, %v513
      %v515 = vpop.f32.mrf.mxu0
      %v516 = vadd.f32 0.0, %v515
      %v517 = vpop.f32.mrf.mxu0
      %v518 = vadd.f32 0.0, %v517
      %519 = vdwg.mxu0
      %v520 = vmax.f32 %v512, %v516
      %v521 = vrot.slane %v520, 4
      %v522 = vmax.f32 %v520, %v521
      %v523 = vrot.slane %v522, 2
      %v524 = vmax.f32 %v522, %v523
      %v525 = vrot.slane %v524, 1
      %v526 = vmax.f32 %v524, %v525
      %v527 = vmax.f32 %v514, %v518
      %v528 = vrot.slane %v527, 4
      %v529 = vmax.f32 %v527, %v528
      %v530 = vrot.slane %v529, 2
      %v531 = vmax.f32 %v529, %v530
      %v532 = vrot.slane %v531, 1
      %v533 = vmax.f32 %v531, %v532
      %v534 = vsub.f32 %v512, %v526
      %v535 = vsub.f32 %v514, %v533
      %v536 = vsub.f32 %v516, %v526
      %v537 = vsub.f32 %v518, %v533
      %v538 = vmul.f32 %v534, 1.442695
      %v539 = vpow.pop %v538
      %v540 = vmul.f32 %v535, 1.442695
      %v541 = vpow.pop %v540
      %v542 = vmul.f32 %v536, 1.442695
      %v543 = vpow.pop %v542
      %v544 = vmul.f32 %v537, 1.442695
      %v545 = vpow.pop %v544
      %v546 = vadd.f32 %v539, %v543
      %v547 = vrot.slane %v546, 4
      %v548 = vadd.f32 %v546, %v547
      %v549 = vrot.slane %v548, 2
      %v550 = vadd.f32 %v548, %v549
      %v551 = vrot.slane %v550, 1
      %v552 = vadd.f32 %v550, %v551
      %v553 = vadd.f32 %v541, %v545
      %v554 = vrot.slane %v553, 4
      %v555 = vadd.f32 %v553, %v554
      %v556 = vrot.slane %v555, 2
      %v557 = vadd.f32 %v555, %v556
      %v558 = vrot.slane %v557, 1
      %v559 = vadd.f32 %v557, %v558
      %v560 = vrcp.pop %v552
      %v561 = vrcp.pop %v559
      %v562 = vmul.f32 %v539, %v560
      %v563 = vmul.f32 %v541, %v561
      %v564 = vmul.f32 %v543, %v560
      %v565 = vmul.f32 %v545, %v561
      %v566 = vpack.c.bf16 %v564, %v562
      %v567 = vpack.c.bf16 %v565, %v563
      %v570 = vunpack.c.l.b16 %v346
      %v571 = vunpack.c.l.b16 %v347
      %v572 = vpack.c.b16 %v571, %v570
      %574 = vxpose.xlu0.c.b16.start [1/8] %v572, 128
      %575 = vxpose.xlu0.c.b16.cont [2/8] 0, 128
      %576 = vxpose.xlu0.c.b16.cont [3/8] 0, 128
      %577 = vxpose.xlu0.c.b16.cont [4/8] 0, 128
      %578 = vxpose.xlu0.c.b16.cont [5/8] 0, 128
      %579 = vxpose.xlu0.c.b16.cont [6/8] 0, 128
      %580 = vxpose.xlu0.c.b16.cont [7/8] 0, 128
      %581 = vxpose.xlu0.c.b16.end [8/8] 0, 128
      %v582 = vpop.trf.xlu0
      %v583 = vpop.trf.xlu0
      %v584 = vpop.trf.xlu0
      %v585 = vpop.trf.xlu0
      %v586 = vpop.trf.xlu0
      %v587 = vpop.trf.xlu0
      %v588 = vpop.trf.xlu0
      %v589 = vpop.trf.xlu0
      %vm590 = vcmask 130048
      %v592 = vsel %vm590, %v582, 0
      %v595 = vsel %vm590, %v583, 0
      %597 = vmatprep.subr.bf16.mxu0 0
      %598 = vmatpush1.bf16.msra.mxu0 0
      %599 = vmatprep.subr.bf16.mxu0 0
      %600 = vmatpush1.bf16.msra.mxu0 0
      %601 = vmatprep.subr.bf16.mxu0 0
      %602 = vmatpush1.bf16.msra.mxu0 0
      %603 = vmatprep.subr.bf16.mxu0 0
      %604 = vmatpush1.bf16.msra.mxu0 0
      %605 = vmatprep.subr.bf16.mxu0 0
      %606 = vmatpush1.bf16.msra.mxu0 0
      %607 = vmatprep.subr.bf16.mxu0 0
      %608 = vmatpush1.bf16.msra.mxu0 0
      %609 = vmatprep.subr.bf16.mxu0 0
      %610 = vmatpush1.bf16.msra.mxu0 0
      %611 = vmatprep.subr.bf16.mxu0 %v567
      %612 = vmatpush1.bf16.msra.mxu0 %v566
      %613 = vmatprep.subr.bf16.mxu0 0
      %614 = vmatpush2.bf16.msra.mxu0 0
      %615 = vmatprep.subr.bf16.mxu0 0
      %616 = vmatpush2.bf16.msra.mxu0 0
      %617 = vmatprep.subr.bf16.mxu0 0
      %618 = vmatpush2.bf16.msra.mxu0 0
      %619 = vmatprep.subr.bf16.mxu0 0
      %620 = vmatpush2.bf16.msra.mxu0 0
      %621 = vmatprep.subr.bf16.mxu0 0
      %622 = vmatpush2.bf16.msra.mxu0 0
      %623 = vmatprep.subr.bf16.mxu0 0
      %624 = vmatpush2.bf16.msra.mxu0 0
      %625 = vmatprep.subr.bf16.mxu0 0
      %626 = vmatpush2.bf16.msra.mxu0 0
      %627 = vmatprep.subr.bf16.mxu0 0
      %628 = vmatpush2.bf16.msra.mxu0 0
      %629 = vmatprep.mubr.bf16.mxu0 0
      %630 = vmatmul.mubr.bf16.gmra.mxu0 %v592
      %v631 = vpop.f32.mrf.mxu0
      %v632 = vadd.f32 0.0, %v631
      %v633 = vpop.f32.mrf.mxu0
      %v634 = vadd.f32 0.0, %v633
      %v635 = vpop.f32.mrf.mxu0
      %v636 = vadd.f32 0.0, %v635
      %v637 = vpop.f32.mrf.mxu0
      %v638 = vadd.f32 0.0, %v637
      %639 = vmatprep.mubr.bf16.mxu0 0
      %640 = vmatmul.mubr.bf16.gmra.mxu0 %v595
      %v641 = vpop.f32.mrf.mxu0
      %v642 = vadd.f32 0.0, %v641
      %v643 = vpop.f32.mrf.mxu0
      %v644 = vadd.f32 0.0, %v643
      %v645 = vpop.f32.mrf.mxu0
      %v646 = vadd.f32 0.0, %v645
      %v647 = vpop.f32.mrf.mxu0
      %v648 = vadd.f32 0.0, %v647
      %649 = vdwg.mxu0
      %v650 = vadd.f32 %v446, %v632
      %v651 = vadd.f32 %v448, %v634
      %v652 = vadd.f32 %v450, %v636
      %v653 = vadd.f32 %v452, %v638
      %v654 = vadd.f32 %v456, %v642
      %v655 = vadd.f32 %v458, %v644
      %v656 = vadd.f32 %v460, %v646
      %v657 = vadd.f32 %v462, %v648
      %v658 = vld [vmem:[%s4] sm:$0xf]
      %v659 = vld [vmem:[%s4 + $0x4] sm:$0xf]
      %v660 = vld [vmem:[%s4 + $0x8] sm:$0xf]
      %v661 = vld [vmem:[%s4 + $0xc] sm:$0xf]
      %s662 = scalar_lea.vmem %s5, 32
      %v663 = vld [vmem:[%s662] sm:$0xff]
      %v664 = vld [vmem:[%s662 + $0x8] sm:$0xff]
      %v665 = vld [vmem:[%s662 + $0x10] sm:$0xff]
      %v666 = vld [vmem:[%s662 + $0x18] sm:$0xff]
      %v667 = vpack.c.bf16 %v652, %v650
      %v668 = vpack.c.bf16 %v653, %v651
      %v669 = vpack.c.bf16 %v656, %v654
      %v670 = vpack.c.bf16 %v657, %v655
      %672 = vset.pattern.permute.xlu0 0
      %673 = vperm.xlu0 %672, %v663
      %v674 = vpop.permute.xlu0 %673
      %677 = vset.pattern.permute.xlu0 0
      %678 = vperm.xlu0 %677, %v664
      %v679 = vpop.permute.xlu0 %678
      %682 = vset.pattern.permute.xlu0 0
      %683 = vperm.xlu0 %682, %v665
      %v684 = vpop.permute.xlu0 %683
      %687 = vset.pattern.permute.xlu0 0
      %688 = vperm.xlu0 %687, %v666
      %v689 = vpop.permute.xlu0 %688
      %v695 = vunpack.c.l.b16 %v658
      %v696 = vunpack.c.l.b16 %v659
      %v697 = vunpack.c.l.b16 %v660
      %v698 = vunpack.c.l.b16 %v661
      %v699 = vpack.c.b16 %v696, %v695
      %v700 = vpack.c.b16 %v698, %v697
      %703 = vxpose.xlu0.c.b16.start [1/8] %v699, 128
      %704 = vxpose.xlu0.c.b16.cont [2/8] %v700, 128
      %705 = vxpose.xlu0.c.b16.cont [3/8] 0, 128
      %706 = vxpose.xlu0.c.b16.cont [4/8] 0, 128
      %707 = vxpose.xlu0.c.b16.cont [5/8] 0, 128
      %708 = vxpose.xlu0.c.b16.cont [6/8] 0, 128
      %709 = vxpose.xlu0.c.b16.cont [7/8] 0, 128
      %710 = vxpose.xlu0.c.b16.end [8/8] 0, 128
      %v711 = vpop.trf.xlu0
      %v712 = vpop.trf.xlu0
      %v713 = vpop.trf.xlu0
      %v714 = vpop.trf.xlu0
      %v715 = vpop.trf.xlu0
      %v716 = vpop.trf.xlu0
      %v717 = vpop.trf.xlu0
      %v718 = vpop.trf.xlu0
      %v720 = vsel %vm473, %v711, 0
      %v723 = vsel %vm473, %v712, 0
      %725 = vmatprep.subr.bf16.mxu0 0
      %726 = vmatpush1.bf16.msra.mxu0 0
      %727 = vmatprep.subr.bf16.mxu0 0
      %728 = vmatpush1.bf16.msra.mxu0 0
      %729 = vmatprep.subr.bf16.mxu0 0
      %730 = vmatpush1.bf16.msra.mxu0 0
      %731 = vmatprep.subr.bf16.mxu0 0
      %732 = vmatpush1.bf16.msra.mxu0 0
      %733 = vmatprep.subr.bf16.mxu0 0
      %734 = vmatpush1.bf16.msra.mxu0 0
      %735 = vmatprep.subr.bf16.mxu0 0
      %736 = vmatpush1.bf16.msra.mxu0 0
      %737 = vmatprep.subr.bf16.mxu0 %v670
      %738 = vmatpush1.bf16.msra.mxu0 %v669
      %739 = vmatprep.subr.bf16.mxu0 %v668
      %740 = vmatpush1.bf16.msra.mxu0 %v667
      %741 = vmatprep.subr.bf16.mxu0 0
      %742 = vmatpush2.bf16.msra.mxu0 0
      %743 = vmatprep.subr.bf16.mxu0 0
      %744 = vmatpush2.bf16.msra.mxu0 0
      %745 = vmatprep.subr.bf16.mxu0 0
      %746 = vmatpush2.bf16.msra.mxu0 0
      %747 = vmatprep.subr.bf16.mxu0 0
      %748 = vmatpush2.bf16.msra.mxu0 0
      %749 = vmatprep.subr.bf16.mxu0 0
      %750 = vmatpush2.bf16.msra.mxu0 0
      %751 = vmatprep.subr.bf16.mxu0 0
      %752 = vmatpush2.bf16.msra.mxu0 0
      %753 = vmatprep.subr.bf16.mxu0 0
      %754 = vmatpush2.bf16.msra.mxu0 0
      %755 = vmatprep.subr.bf16.mxu0 0
      %756 = vmatpush2.bf16.msra.mxu0 0
      %757 = vmatprep.mubr.bf16.mxu0 0
      %758 = vmatmul.mubr.bf16.gmra.mxu0 %v720
      %v759 = vpop.f32.mrf.mxu0
      %v760 = vadd.f32 %v674, %v759
      %v761 = vpop.f32.mrf.mxu0
      %v762 = vadd.f32 %v674, %v761
      %v763 = vpop.f32.mrf.mxu0
      %v764 = vadd.f32 %v679, %v763
      %v765 = vpop.f32.mrf.mxu0
      %v766 = vadd.f32 %v679, %v765
      %767 = vmatprep.mubr.bf16.mxu0 0
      %768 = vmatmul.mubr.bf16.gmra.mxu0 %v723
      %v769 = vpop.f32.mrf.mxu0
      %v770 = vadd.f32 %v684, %v769
      %v771 = vpop.f32.mrf.mxu0
      %v772 = vadd.f32 %v684, %v771
      %v773 = vpop.f32.mrf.mxu0
      %v774 = vadd.f32 %v689, %v773
      %v775 = vpop.f32.mrf.mxu0
      %v776 = vadd.f32 %v689, %v775
      %777 = vdwg.mxu0
      %s778 = scalar_lea.vmem %s4, 16
      %v779 = vld [vmem:[%s778] sm:$0xf]
      %v780 = vld [vmem:[%s778 + $0x4] sm:$0xf]
      %v781 = vld [vmem:[%s778 + $0x8] sm:$0xf]
      %v782 = vld [vmem:[%s778 + $0xc] sm:$0xf]
      %s783 = scalar_lea.vmem %s5, 64
      %v784 = vld [vmem:[%s783] sm:$0xff]
      %v785 = vld [vmem:[%s783 + $0x8] sm:$0xff]
      %v786 = vld [vmem:[%s783 + $0x10] sm:$0xff]
      %v787 = vld [vmem:[%s783 + $0x18] sm:$0xff]
      %v788 = vpack.c.bf16 %v764, %v760
      %v789 = vpack.c.bf16 %v766, %v762
      %v790 = vpack.c.bf16 %v774, %v770
      %v791 = vpack.c.bf16 %v776, %v772
      %793 = vset.pattern.permute.xlu0 0
      %794 = vperm.xlu0 %793, %v784
      %v795 = vpop.permute.xlu0 %794
      %798 = vset.pattern.permute.xlu0 0
      %799 = vperm.xlu0 %798, %v785
      %v800 = vpop.permute.xlu0 %799
      %803 = vset.pattern.permute.xlu0 0
      %804 = vperm.xlu0 %803, %v786
      %v805 = vpop.permute.xlu0 %804
      %808 = vset.pattern.permute.xlu0 0
      %809 = vperm.xlu0 %808, %v787
      %v810 = vpop.permute.xlu0 %809
      %v816 = vunpack.c.l.b16 %v779
      %v817 = vunpack.c.l.b16 %v780
      %v818 = vunpack.c.l.b16 %v781
      %v819 = vunpack.c.l.b16 %v782
      %v820 = vpack.c.b16 %v817, %v816
      %v821 = vpack.c.b16 %v819, %v818
      %824 = vxpose.xlu0.c.b16.start [1/8] %v820, 128
      %825 = vxpose.xlu0.c.b16.cont [2/8] %v821, 128
      %826 = vxpose.xlu0.c.b16.cont [3/8] 0, 128
      %827 = vxpose.xlu0.c.b16.cont [4/8] 0, 128
      %828 = vxpose.xlu0.c.b16.cont [5/8] 0, 128
      %829 = vxpose.xlu0.c.b16.cont [6/8] 0, 128
      %830 = vxpose.xlu0.c.b16.cont [7/8] 0, 128
      %831 = vxpose.xlu0.c.b16.end [8/8] 0, 128
      %v832 = vpop.trf.xlu0
      %v833 = vpop.trf.xlu0
      %v834 = vpop.trf.xlu0
      %v835 = vpop.trf.xlu0
      %v836 = vpop.trf.xlu0
      %v837 = vpop.trf.xlu0
      %v838 = vpop.trf.xlu0
      %v839 = vpop.trf.xlu0
      %v841 = vsel %vm473, %v832, 0
      %v844 = vsel %vm473, %v833, 0
      %846 = vmatprep.subr.bf16.mxu0 0
      %847 = vmatpush1.bf16.msra.mxu0 0
      %848 = vmatprep.subr.bf16.mxu0 0
      %849 = vmatpush1.bf16.msra.mxu0 0
      %850 = vmatprep.subr.bf16.mxu0 0
      %851 = vmatpush1.bf16.msra.mxu0 0
      %852 = vmatprep.subr.bf16.mxu0 0
      %853 = vmatpush1.bf16.msra.mxu0 0
      %854 = vmatprep.subr.bf16.mxu0 0
      %855 = vmatpush1.bf16.msra.mxu0 0
      %856 = vmatprep.subr.bf16.mxu0 0
      %857 = vmatpush1.bf16.msra.mxu0 0
      %858 = vmatprep.subr.bf16.mxu0 %v791
      %859 = vmatpush1.bf16.msra.mxu0 %v790
      %860 = vmatprep.subr.bf16.mxu0 %v789
      %861 = vmatpush1.bf16.msra.mxu0 %v788
      %862 = vmatprep.subr.bf16.mxu0 0
      %863 = vmatpush2.bf16.msra.mxu0 0
      %864 = vmatprep.subr.bf16.mxu0 0
      %865 = vmatpush2.bf16.msra.mxu0 0
      %866 = vmatprep.subr.bf16.mxu0 0
      %867 = vmatpush2.bf16.msra.mxu0 0
      %868 = vmatprep.subr.bf16.mxu0 0
      %869 = vmatpush2.bf16.msra.mxu0 0
      %870 = vmatprep.subr.bf16.mxu0 0
      %871 = vmatpush2.bf16.msra.mxu0 0
      %872 = vmatprep.subr.bf16.mxu0 0
      %873 = vmatpush2.bf16.msra.mxu0 0
      %874 = vmatprep.subr.bf16.mxu0 0
      %875 = vmatpush2.bf16.msra.mxu0 0
      %876 = vmatprep.subr.bf16.mxu0 0
      %877 = vmatpush2.bf16.msra.mxu0 0
      %878 = vmatprep.mubr.bf16.mxu0 0
      %879 = vmatmul.mubr.bf16.gmra.mxu0 %v841
      %v880 = vpop.f32.mrf.mxu0
      %v881 = vadd.f32 %v795, %v880
      %v882 = vpop.f32.mrf.mxu0
      %v883 = vadd.f32 %v795, %v882
      %v884 = vpop.f32.mrf.mxu0
      %v885 = vadd.f32 %v800, %v884
      %v886 = vpop.f32.mrf.mxu0
      %v887 = vadd.f32 %v800, %v886
      %888 = vmatprep.mubr.bf16.mxu0 0
      %889 = vmatmul.mubr.bf16.gmra.mxu0 %v844
      %v890 = vpop.f32.mrf.mxu0
      %v891 = vadd.f32 %v805, %v890
      %v892 = vpop.f32.mrf.mxu0
      %v893 = vadd.f32 %v805, %v892
      %v894 = vpop.f32.mrf.mxu0
      %v895 = vadd.f32 %v810, %v894
      %v896 = vpop.f32.mrf.mxu0
      %v897 = vadd.f32 %v810, %v896
      %898 = vdwg.mxu0
      %v899 = vpack.c.bf16 %v885, %v881
      %v900 = vpack.c.bf16 %v887, %v883
      %v901 = vpack.c.bf16 %v895, %v891
      %v902 = vpack.c.bf16 %v897, %v893
      %903 = vmatprep.subr.bf16.mxu0 0
      %904 = vmatpush1.bf16.msra.mxu0 0
      %905 = vmatprep.subr.bf16.mxu0 0
      %906 = vmatpush1.bf16.msra.mxu0 0
      %907 = vmatprep.subr.bf16.mxu0 0
      %908 = vmatpush1.bf16.msra.mxu0 0
      %909 = vmatprep.subr.bf16.mxu0 0
      %910 = vmatpush1.bf16.msra.mxu0 0
      %911 = vmatprep.subr.bf16.mxu0 0
      %912 = vmatpush1.bf16.msra.mxu0 0
      %913 = vmatprep.subr.bf16.mxu0 0
      %914 = vmatpush1.bf16.msra.mxu0 0
      %915 = vmatprep.subr.bf16.mxu0 %v902
      %916 = vmatpush1.bf16.msra.mxu0 %v901
      %917 = vmatprep.subr.bf16.mxu0 %v900
      %918 = vmatpush1.bf16.msra.mxu0 %v899
      %919 = vmatprep.subr.bf16.mxu0 0
      %920 = vmatpush2.bf16.msra.mxu0 0
      %921 = vmatprep.subr.bf16.mxu0 0
      %922 = vmatpush2.bf16.msra.mxu0 0
      %923 = vmatprep.subr.bf16.mxu0 0
      %924 = vmatpush2.bf16.msra.mxu0 0
      %925 = vmatprep.subr.bf16.mxu0 0
      %926 = vmatpush2.bf16.msra.mxu0 0
      %927 = vmatprep.subr.bf16.mxu0 0
      %928 = vmatpush2.bf16.msra.mxu0 0
      %929 = vmatprep.subr.bf16.mxu0 0
      %930 = vmatpush2.bf16.msra.mxu0 0
      %931 = vmatprep.subr.bf16.mxu0 0
      %932 = vmatpush2.bf16.msra.mxu0 0
      %933 = vmatprep.subr.bf16.mxu0 0
      %934 = vmatpush2.bf16.msra.mxu0 0
      %935 = vmatprep.mubr.bf16.mxu0 0
      %936 = vmatmul.mubr.bf16.gmra.mxu0 %v475
      %v937 = vpop.f32.mrf.mxu0
      %v938 = vadd.f32 0.0, %v937
      %v939 = vpop.f32.mrf.mxu0
      %v940 = vadd.f32 0.0, %v939
      %v941 = vpop.f32.mrf.mxu0
      %v942 = vadd.f32 0.0, %v941
      %v943 = vpop.f32.mrf.mxu0
      %v944 = vadd.f32 0.0, %v943
      %945 = vdwg.mxu0
      %v946 = vmax.f32 %v938, %v942
      %v947 = vrot.slane %v946, 4
      %v948 = vmax.f32 %v946, %v947
      %v949 = vrot.slane %v948, 2
      %v950 = vmax.f32 %v948, %v949
      %v951 = vrot.slane %v950, 1
      %v952 = vmax.f32 %v950, %v951
      %v953 = vmax.f32 %v940, %v944
      %v954 = vrot.slane %v953, 4
      %v955 = vmax.f32 %v953, %v954
      %v956 = vrot.slane %v955, 2
      %v957 = vmax.f32 %v955, %v956
      %v958 = vrot.slane %v957, 1
      %v959 = vmax.f32 %v957, %v958
      %v960 = vsub.f32 %v938, %v952
      %v961 = vsub.f32 %v940, %v959
      %v962 = vsub.f32 %v942, %v952
      %v963 = vsub.f32 %v944, %v959
      %v964 = vmul.f32 %v960, 1.442695
      %v965 = vpow.pop %v964
      %v966 = vmul.f32 %v961, 1.442695
      %v967 = vpow.pop %v966
      %v968 = vmul.f32 %v962, 1.442695
      %v969 = vpow.pop %v968
      %v970 = vmul.f32 %v963, 1.442695
      %v971 = vpow.pop %v970
      %v972 = vadd.f32 %v965, %v969
      %v973 = vrot.slane %v972, 4
      %v974 = vadd.f32 %v972, %v973
      %v975 = vrot.slane %v974, 2
      %v976 = vadd.f32 %v974, %v975
      %v977 = vrot.slane %v976, 1
      %v978 = vadd.f32 %v976, %v977
      %v979 = vadd.f32 %v967, %v971
      %v980 = vrot.slane %v979, 4
      %v981 = vadd.f32 %v979, %v980
      %v982 = vrot.slane %v981, 2
      %v983 = vadd.f32 %v981, %v982
      %v984 = vrot.slane %v983, 1
      %v985 = vadd.f32 %v983, %v984
      %v986 = vrcp.pop %v978
      %v987 = vrcp.pop %v985
      %v988 = vmul.f32 %v965, %v986
      %v989 = vmul.f32 %v967, %v987
      %v990 = vmul.f32 %v969, %v986
      %v991 = vmul.f32 %v971, %v987
      %v992 = vpack.c.bf16 %v990, %v988
      %v993 = vpack.c.bf16 %v991, %v989
      %994 = vmatprep.subr.bf16.mxu0 0
      %995 = vmatpush1.bf16.msra.mxu0 0
      %996 = vmatprep.subr.bf16.mxu0 0
      %997 = vmatpush1.bf16.msra.mxu0 0
      %998 = vmatprep.subr.bf16.mxu0 0
      %999 = vmatpush1.bf16.msra.mxu0 0
      %1000 = vmatprep.subr.bf16.mxu0 0
      %1001 = vmatpush1.bf16.msra.mxu0 0
      %1002 = vmatprep.subr.bf16.mxu0 0
      %1003 = vmatpush1.bf16.msra.mxu0 0
      %1004 = vmatprep.subr.bf16.mxu0 0
      %1005 = vmatpush1.bf16.msra.mxu0 0
      %1006 = vmatprep.subr.bf16.mxu0 0
      %1007 = vmatpush1.bf16.msra.mxu0 0
      %1008 = vmatprep.subr.bf16.mxu0 %v993
      %1009 = vmatpush1.bf16.msra.mxu0 %v992
      %1010 = vmatprep.subr.bf16.mxu0 0
      %1011 = vmatpush2.bf16.msra.mxu0 0
      %1012 = vmatprep.subr.bf16.mxu0 0
      %1013 = vmatpush2.bf16.msra.mxu0 0
      %1014 = vmatprep.subr.bf16.mxu0 0
      %1015 = vmatpush2.bf16.msra.mxu0 0
      %1016 = vmatprep.subr.bf16.mxu0 0
      %1017 = vmatpush2.bf16.msra.mxu0 0
      %1018 = vmatprep.subr.bf16.mxu0 0
      %1019 = vmatpush2.bf16.msra.mxu0 0
      %1020 = vmatprep.subr.bf16.mxu0 0
      %1021 = vmatpush2.bf16.msra.mxu0 0
      %1022 = vmatprep.subr.bf16.mxu0 0
      %1023 = vmatpush2.bf16.msra.mxu0 0
      %1024 = vmatprep.subr.bf16.mxu0 0
      %1025 = vmatpush2.bf16.msra.mxu0 0
      %1026 = vmatprep.mubr.bf16.mxu0 0
      %1027 = vmatmul.mubr.bf16.gmra.mxu0 %v592
      %v1028 = vpop.f32.mrf.mxu0
      %v1029 = vadd.f32 0.0, %v1028
      %v1030 = vpop.f32.mrf.mxu0
      %v1031 = vadd.f32 0.0, %v1030
      %v1032 = vpop.f32.mrf.mxu0
      %v1033 = vadd.f32 0.0, %v1032
      %v1034 = vpop.f32.mrf.mxu0
      %v1035 = vadd.f32 0.0, %v1034
      %1036 = vmatprep.mubr.bf16.mxu0 0
      %1037 = vmatmul.mubr.bf16.gmra.mxu0 %v595
      %v1038 = vpop.f32.mrf.mxu0
      %v1039 = vadd.f32 0.0, %v1038
      %v1040 = vpop.f32.mrf.mxu0
      %v1041 = vadd.f32 0.0, %v1040
      %v1042 = vpop.f32.mrf.mxu0
      %v1043 = vadd.f32 0.0, %v1042
      %v1044 = vpop.f32.mrf.mxu0
      %v1045 = vadd.f32 0.0, %v1044
      %1046 = vdwg.mxu0
      %v1047 = vadd.f32 %v881, %v1029
      %v1048 = vadd.f32 %v883, %v1031
      %v1049 = vadd.f32 %v885, %v1033
      %v1050 = vadd.f32 %v887, %v1035
      %v1051 = vadd.f32 %v891, %v1039
      %v1052 = vadd.f32 %v893, %v1041
      %v1053 = vadd.f32 %v895, %v1043
      %v1054 = vadd.f32 %v897, %v1045
      %s1055 = scalar_lea.vmem %s4, 32
      %v1056 = vld [vmem:[%s1055] sm:$0xf]
      %v1057 = vld [vmem:[%s1055 + $0x4] sm:$0xf]
      %v1058 = vld [vmem:[%s1055 + $0x8] sm:$0xf]
      %v1059 = vld [vmem:[%s1055 + $0xc] sm:$0xf]
      %s1060 = scalar_lea.vmem %s5, 96
      %v1061 = vld [vmem:[%s1060] sm:$0xff]
      %v1062 = vld [vmem:[%s1060 + $0x8] sm:$0xff]
      %v1063 = vld [vmem:[%s1060 + $0x10] sm:$0xff]
      %v1064 = vld [vmem:[%s1060 + $0x18] sm:$0xff]
      %v1065 = vpack.c.bf16 %v1049, %v1047
      %v1066 = vpack.c.bf16 %v1050, %v1048
      %v1067 = vpack.c.bf16 %v1053, %v1051
      %v1068 = vpack.c.bf16 %v1054, %v1052
      %1070 = vset.pattern.permute.xlu0 0
      %1071 = vperm.xlu0 %1070, %v1061
      %v1072 = vpop.permute.xlu0 %1071
      %1075 = vset.pattern.permute.xlu0 0
      %1076 = vperm.xlu0 %1075, %v1062
      %v1077 = vpop.permute.xlu0 %1076
      %1080 = vset.pattern.permute.xlu0 0
      %1081 = vperm.xlu0 %1080, %v1063
      %v1082 = vpop.permute.xlu0 %1081
      %1085 = vset.pattern.permute.xlu0 0
      %1086 = vperm.xlu0 %1085, %v1064
      %v1087 = vpop.permute.xlu0 %1086
      %v1093 = vunpack.c.l.b16 %v1056
      %v1094 = vunpack.c.l.b16 %v1057
      %v1095 = vunpack.c.l.b16 %v1058
      %v1096 = vunpack.c.l.b16 %v1059
      %v1097 = vpack.c.b16 %v1094, %v1093
      %v1098 = vpack.c.b16 %v1096, %v1095
      %1101 = vxpose.xlu0.c.b16.start [1/8] %v1097, 128
      %1102 = vxpose.xlu0.c.b16.cont [2/8] %v1098, 128
      %1103 = vxpose.xlu0.c.b16.cont [3/8] 0, 128
      %1104 = vxpose.xlu0.c.b16.cont [4/8] 0, 128
      %1105 = vxpose.xlu0.c.b16.cont [5/8] 0, 128
      %1106 = vxpose.xlu0.c.b16.cont [6/8] 0, 128
      %1107 = vxpose.xlu0.c.b16.cont [7/8] 0, 128
      %1108 = vxpose.xlu0.c.b16.end [8/8] 0, 128
      %v1109 = vpop.trf.xlu0
      %v1110 = vpop.trf.xlu0
      %v1111 = vpop.trf.xlu0
      %v1112 = vpop.trf.xlu0
      %v1113 = vpop.trf.xlu0
      %v1114 = vpop.trf.xlu0
      %v1115 = vpop.trf.xlu0
      %v1116 = vpop.trf.xlu0
      %v1118 = vsel %vm473, %v1109, 0
      %v1121 = vsel %vm473, %v1110, 0
      %1123 = vmatprep.subr.bf16.mxu0 0
      %1124 = vmatpush1.bf16.msra.mxu0 0
      %1125 = vmatprep.subr.bf16.mxu0 0
      %1126 = vmatpush1.bf16.msra.mxu0 0
      %1127 = vmatprep.subr.bf16.mxu0 0
      %1128 = vmatpush1.bf16.msra.mxu0 0
      %1129 = vmatprep.subr.bf16.mxu0 0
      %1130 = vmatpush1.bf16.msra.mxu0 0
      %1131 = vmatprep.subr.bf16.mxu0 0
      %1132 = vmatpush1.bf16.msra.mxu0 0
      %1133 = vmatprep.subr.bf16.mxu0 0
      %1134 = vmatpush1.bf16.msra.mxu0 0
      %1135 = vmatprep.subr.bf16.mxu0 %v1068
      %1136 = vmatpush1.bf16.msra.mxu0 %v1067
      %1137 = vmatprep.subr.bf16.mxu0 %v1066
      %1138 = vmatpush1.bf16.msra.mxu0 %v1065
      %1139 = vmatprep.subr.bf16.mxu0 0
      %1140 = vmatpush2.bf16.msra.mxu0 0
      %1141 = vmatprep.subr.bf16.mxu0 0
      %1142 = vmatpush2.bf16.msra.mxu0 0
      %1143 = vmatprep.subr.bf16.mxu0 0
      %1144 = vmatpush2.bf16.msra.mxu0 0
      %1145 = vmatprep.subr.bf16.mxu0 0
      %1146 = vmatpush2.bf16.msra.mxu0 0
      %1147 = vmatprep.subr.bf16.mxu0 0
      %1148 = vmatpush2.bf16.msra.mxu0 0
      %1149 = vmatprep.subr.bf16.mxu0 0
      %1150 = vmatpush2.bf16.msra.mxu0 0
      %1151 = vmatprep.subr.bf16.mxu0 0
      %1152 = vmatpush2.bf16.msra.mxu0 0
      %1153 = vmatprep.subr.bf16.mxu0 0
      %1154 = vmatpush2.bf16.msra.mxu0 0
      %1155 = vmatprep.mubr.bf16.mxu0 0
      %1156 = vmatmul.mubr.bf16.gmra.mxu0 %v1118
      %v1157 = vpop.f32.mrf.mxu0
      %v1158 = vadd.f32 %v1072, %v1157
      %v1159 = vpop.f32.mrf.mxu0
      %v1160 = vadd.f32 %v1072, %v1159
      %v1161 = vpop.f32.mrf.mxu0
      %v1162 = vadd.f32 %v1077, %v1161
      %v1163 = vpop.f32.mrf.mxu0
      %v1164 = vadd.f32 %v1077, %v1163
      %1165 = vmatprep.mubr.bf16.mxu0 0
      %1166 = vmatmul.mubr.bf16.gmra.mxu0 %v1121
      %v1167 = vpop.f32.mrf.mxu0
      %v1168 = vadd.f32 %v1082, %v1167
      %v1169 = vpop.f32.mrf.mxu0
      %v1170 = vadd.f32 %v1082, %v1169
      %v1171 = vpop.f32.mrf.mxu0
      %v1172 = vadd.f32 %v1087, %v1171
      %v1173 = vpop.f32.mrf.mxu0
      %v1174 = vadd.f32 %v1087, %v1173
      %1175 = vdwg.mxu0
      %s1176 = scalar_lea.vmem %s4, 48
      %v1177 = vld [vmem:[%s1176] sm:$0xf]
      %v1178 = vld [vmem:[%s1176 + $0x4] sm:$0xf]
      %v1179 = vld [vmem:[%s1176 + $0x8] sm:$0xf]
      %v1180 = vld [vmem:[%s1176 + $0xc] sm:$0xf]
      %s1181 = scalar_lea.vmem %s5, 128
      %v1182 = vld [vmem:[%s1181] sm:$0xff]
      %v1183 = vld [vmem:[%s1181 + $0x8] sm:$0xff]
      %v1184 = vld [vmem:[%s1181 + $0x10] sm:$0xff]
      %v1185 = vld [vmem:[%s1181 + $0x18] sm:$0xff]
      %v1186 = vpack.c.bf16 %v1162, %v1158
      %v1187 = vpack.c.bf16 %v1164, %v1160
      %v1188 = vpack.c.bf16 %v1172, %v1168
      %v1189 = vpack.c.bf16 %v1174, %v1170
      %1191 = vset.pattern.permute.xlu0 0
      %1192 = vperm.xlu0 %1191, %v1182
      %v1193 = vpop.permute.xlu0 %1192
      %1196 = vset.pattern.permute.xlu0 0
      %1197 = vperm.xlu0 %1196, %v1183
      %v1198 = vpop.permute.xlu0 %1197
      %1201 = vset.pattern.permute.xlu0 0
      %1202 = vperm.xlu0 %1201, %v1184
      %v1203 = vpop.permute.xlu0 %1202
      %1206 = vset.pattern.permute.xlu0 0
      %1207 = vperm.xlu0 %1206, %v1185
      %v1208 = vpop.permute.xlu0 %1207
      %v1214 = vunpack.c.l.b16 %v1177
      %v1215 = vunpack.c.l.b16 %v1178
      %v1216 = vunpack.c.l.b16 %v1179
      %v1217 = vunpack.c.l.b16 %v1180
      %v1218 = vpack.c.b16 %v1215, %v1214
      %v1219 = vpack.c.b16 %v1217, %v1216
      %1222 = vxpose.xlu0.c.b16.start [1/8] %v1218, 128
      %1223 = vxpose.xlu0.c.b16.cont [2/8] %v1219, 128
      %1224 = vxpose.xlu0.c.b16.cont [3/8] 0, 128
      %1225 = vxpose.xlu0.c.b16.cont [4/8] 0, 128
      %1226 = vxpose.xlu0.c.b16.cont [5/8] 0, 128
      %1227 = vxpose.xlu0.c.b16.cont [6/8] 0, 128
      %1228 = vxpose.xlu0.c.b16.cont [7/8] 0, 128
      %1229 = vxpose.xlu0.c.b16.end [8/8] 0, 128
      %v1230 = vpop.trf.xlu0
      %v1231 = vpop.trf.xlu0
      %v1232 = vpop.trf.xlu0
      %v1233 = vpop.trf.xlu0
      %v1234 = vpop.trf.xlu0
      %v1235 = vpop.trf.xlu0
      %v1236 = vpop.trf.xlu0
      %v1237 = vpop.trf.xlu0
      %v1239 = vsel %vm473, %v1230, 0
      %v1242 = vsel %vm473, %v1231, 0
      %1244 = vmatprep.subr.bf16.mxu0 0
      %1245 = vmatpush1.bf16.msra.mxu0 0
      %1246 = vmatprep.subr.bf16.mxu0 0
      %1247 = vmatpush1.bf16.msra.mxu0 0
      %1248 = vmatprep.subr.bf16.mxu0 0
      %1249 = vmatpush1.bf16.msra.mxu0 0
      %1250 = vmatprep.subr.bf16.mxu0 0
      %1251 = vmatpush1.bf16.msra.mxu0 0
      %1252 = vmatprep.subr.bf16.mxu0 0
      %1253 = vmatpush1.bf16.msra.mxu0 0
      %1254 = vmatprep.subr.bf16.mxu0 0
      %1255 = vmatpush1.bf16.msra.mxu0 0
      %1256 = vmatprep.subr.bf16.mxu0 %v1189
      %1257 = vmatpush1.bf16.msra.mxu0 %v1188
      %1258 = vmatprep.subr.bf16.mxu0 %v1187
      %1259 = vmatpush1.bf16.msra.mxu0 %v1186
      %1260 = vmatprep.subr.bf16.mxu0 0
      %1261 = vmatpush2.bf16.msra.mxu0 0
      %1262 = vmatprep.subr.bf16.mxu0 0
      %1263 = vmatpush2.bf16.msra.mxu0 0
      %1264 = vmatprep.subr.bf16.mxu0 0
      %1265 = vmatpush2.bf16.msra.mxu0 0
      %1266 = vmatprep.subr.bf16.mxu0 0
      %1267 = vmatpush2.bf16.msra.mxu0 0
      %1268 = vmatprep.subr.bf16.mxu0 0
      %1269 = vmatpush2.bf16.msra.mxu0 0
      %1270 = vmatprep.subr.bf16.mxu0 0
      %1271 = vmatpush2.bf16.msra.mxu0 0
      %1272 = vmatprep.subr.bf16.mxu0 0
      %1273 = vmatpush2.bf16.msra.mxu0 0
      %1274 = vmatprep.subr.bf16.mxu0 0
      %1275 = vmatpush2.bf16.msra.mxu0 0
      %1276 = vmatprep.mubr.bf16.mxu0 0
      %1277 = vmatmul.mubr.bf16.gmra.mxu0 %v1239
      %v1278 = vpop.f32.mrf.mxu0
      %v1279 = vadd.f32 %v1193, %v1278
      %v1280 = vpop.f32.mrf.mxu0
      %v1281 = vadd.f32 %v1193, %v1280
      %v1282 = vpop.f32.mrf.mxu0
      %v1283 = vadd.f32 %v1198, %v1282
      %v1284 = vpop.f32.mrf.mxu0
      %v1285 = vadd.f32 %v1198, %v1284
      %1286 = vmatprep.mubr.bf16.mxu0 0
      %1287 = vmatmul.mubr.bf16.gmra.mxu0 %v1242
      %v1288 = vpop.f32.mrf.mxu0
      %v1289 = vadd.f32 %v1203, %v1288
      %v1290 = vpop.f32.mrf.mxu0
      %v1291 = vadd.f32 %v1203, %v1290
      %v1292 = vpop.f32.mrf.mxu0
      %v1293 = vadd.f32 %v1208, %v1292
      %v1294 = vpop.f32.mrf.mxu0
      %v1295 = vadd.f32 %v1208, %v1294
      %1296 = vdwg.mxu0
      %v1297 = vpack.c.bf16 %v1283, %v1279
      %v1298 = vpack.c.bf16 %v1285, %v1281
      %v1299 = vpack.c.bf16 %v1293, %v1289
      %v1300 = vpack.c.bf16 %v1295, %v1291
      %1301 = vmatprep.subr.bf16.mxu0 0
      %1302 = vmatpush1.bf16.msra.mxu0 0
      %1303 = vmatprep.subr.bf16.mxu0 0
      %1304 = vmatpush1.bf16.msra.mxu0 0
      %1305 = vmatprep.subr.bf16.mxu0 0
      %1306 = vmatpush1.bf16.msra.mxu0 0
      %1307 = vmatprep.subr.bf16.mxu0 0
      %1308 = vmatpush1.bf16.msra.mxu0 0
      %1309 = vmatprep.subr.bf16.mxu0 0
      %1310 = vmatpush1.bf16.msra.mxu0 0
      %1311 = vmatprep.subr.bf16.mxu0 0
      %1312 = vmatpush1.bf16.msra.mxu0 0
      %1313 = vmatprep.subr.bf16.mxu0 %v1300
      %1314 = vmatpush1.bf16.msra.mxu0 %v1299
      %1315 = vmatprep.subr.bf16.mxu0 %v1298
      %1316 = vmatpush1.bf16.msra.mxu0 %v1297
      %1317 = vmatprep.subr.bf16.mxu0 0
      %1318 = vmatpush2.bf16.msra.mxu0 0
      %1319 = vmatprep.subr.bf16.mxu0 0
      %1320 = vmatpush2.bf16.msra.mxu0 0
      %1321 = vmatprep.subr.bf16.mxu0 0
      %1322 = vmatpush2.bf16.msra.mxu0 0
      %1323 = vmatprep.subr.bf16.mxu0 0
      %1324 = vmatpush2.bf16.msra.mxu0 0
      %1325 = vmatprep.subr.bf16.mxu0 0
      %1326 = vmatpush2.bf16.msra.mxu0 0
      %1327 = vmatprep.subr.bf16.mxu0 0
      %1328 = vmatpush2.bf16.msra.mxu0 0
      %1329 = vmatprep.subr.bf16.mxu0 0
      %1330 = vmatpush2.bf16.msra.mxu0 0
      %1331 = vmatprep.subr.bf16.mxu0 0
      %1332 = vmatpush2.bf16.msra.mxu0 0
      %1333 = vmatprep.mubr.bf16.mxu0 0
      %1334 = vmatmul.mubr.bf16.gmra.mxu0 %v475
      %v1335 = vpop.f32.mrf.mxu0
      %v1336 = vadd.f32 0.0, %v1335
      %v1337 = vpop.f32.mrf.mxu0
      %v1338 = vadd.f32 0.0, %v1337
      %v1339 = vpop.f32.mrf.mxu0
      %v1340 = vadd.f32 0.0, %v1339
      %v1341 = vpop.f32.mrf.mxu0
      %v1342 = vadd.f32 0.0, %v1341
      %1343 = vdwg.mxu0
      %v1344 = vmax.f32 %v1336, %v1340
      %v1345 = vrot.slane %v1344, 4
      %v1346 = vmax.f32 %v1344, %v1345
      %v1347 = vrot.slane %v1346, 2
      %v1348 = vmax.f32 %v1346, %v1347
      %v1349 = vrot.slane %v1348, 1
      %v1350 = vmax.f32 %v1348, %v1349
      %v1351 = vmax.f32 %v1338, %v1342
      %v1352 = vrot.slane %v1351, 4
      %v1353 = vmax.f32 %v1351, %v1352
      %v1354 = vrot.slane %v1353, 2
      %v1355 = vmax.f32 %v1353, %v1354
      %v1356 = vrot.slane %v1355, 1
      %v1357 = vmax.f32 %v1355, %v1356
      %v1358 = vsub.f32 %v1336, %v1350
      %v1359 = vsub.f32 %v1338, %v1357
      %v1360 = vsub.f32 %v1340, %v1350
      %v1361 = vsub.f32 %v1342, %v1357
      %v1362 = vmul.f32 %v1358, 1.442695
      %v1363 = vpow.pop %v1362
      %v1364 = vmul.f32 %v1359, 1.442695
      %v1365 = vpow.pop %v1364
      %v1366 = vmul.f32 %v1360, 1.442695
      %v1367 = vpow.pop %v1366
      %v1368 = vmul.f32 %v1361, 1.442695
      %v1369 = vpow.pop %v1368
      %v1370 = vadd.f32 %v1363, %v1367
      %v1371 = vrot.slane %v1370, 4
      %v1372 = vadd.f32 %v1370, %v1371
      %v1373 = vrot.slane %v1372, 2
      %v1374 = vadd.f32 %v1372, %v1373
      %v1375 = vrot.slane %v1374, 1
      %v1376 = vadd.f32 %v1374, %v1375
      %v1377 = vadd.f32 %v1365, %v1369
      %v1378 = vrot.slane %v1377, 4
      %v1379 = vadd.f32 %v1377, %v1378
      %v1380 = vrot.slane %v1379, 2
      %v1381 = vadd.f32 %v1379, %v1380
      %v1382 = vrot.slane %v1381, 1
      %v1383 = vadd.f32 %v1381, %v1382
      %v1384 = vrcp.pop %v1376
      %v1385 = vrcp.pop %v1383
      %v1386 = vmul.f32 %v1363, %v1384
      %v1387 = vmul.f32 %v1365, %v1385
      %v1388 = vmul.f32 %v1367, %v1384
      %v1389 = vmul.f32 %v1369, %v1385
      %v1390 = vpack.c.bf16 %v1388, %v1386
      %v1391 = vpack.c.bf16 %v1389, %v1387
      %1392 = vmatprep.subr.bf16.mxu0 0
      %1393 = vmatpush1.bf16.msra.mxu0 0
      %1394 = vmatprep.subr.bf16.mxu0 0
      %1395 = vmatpush1.bf16.msra.mxu0 0
      %1396 = vmatprep.subr.bf16.mxu0 0
      %1397 = vmatpush1.bf16.msra.mxu0 0
      %1398 = vmatprep.subr.bf16.mxu0 0
      %1399 = vmatpush1.bf16.msra.mxu0 0
      %1400 = vmatprep.subr.bf16.mxu0 0
      %1401 = vmatpush1.bf16.msra.mxu0 0
      %1402 = vmatprep.subr.bf16.mxu0 0
      %1403 = vmatpush1.bf16.msra.mxu0 0
      %1404 = vmatprep.subr.bf16.mxu0 0
      %1405 = vmatpush1.bf16.msra.mxu0 0
      %1406 = vmatprep.subr.bf16.mxu0 %v1391
      %1407 = vmatpush1.bf16.msra.mxu0 %v1390
      %1408 = vmatprep.subr.bf16.mxu0 0
      %1409 = vmatpush2.bf16.msra.mxu0 0
      %1410 = vmatprep.subr.bf16.mxu0 0
      %1411 = vmatpush2.bf16.msra.mxu0 0
      %1412 = vmatprep.subr.bf16.mxu0 0
      %1413 = vmatpush2.bf16.msra.mxu0 0
      %1414 = vmatprep.subr.bf16.mxu0 0
      %1415 = vmatpush2.bf16.msra.mxu0 0
      %1416 = vmatprep.subr.bf16.mxu0 0
      %1417 = vmatpush2.bf16.msra.mxu0 0
      %1418 = vmatprep.subr.bf16.mxu0 0
      %1419 = vmatpush2.bf16.msra.mxu0 0
      %1420 = vmatprep.subr.bf16.mxu0 0
      %1421 = vmatpush2.bf16.msra.mxu0 0
      %1422 = vmatprep.subr.bf16.mxu0 0
      %1423 = vmatpush2.bf16.msra.mxu0 0
      %1424 = vmatprep.mubr.bf16.mxu0 0
      %1425 = vmatmul.mubr.bf16.gmra.mxu0 %v592
      %v1426 = vpop.f32.mrf.mxu0
      %v1427 = vadd.f32 0.0, %v1426
      %v1428 = vpop.f32.mrf.mxu0
      %v1429 = vadd.f32 0.0, %v1428
      %v1430 = vpop.f32.mrf.mxu0
      %v1431 = vadd.f32 0.0, %v1430
      %v1432 = vpop.f32.mrf.mxu0
      %v1433 = vadd.f32 0.0, %v1432
      %1434 = vmatprep.mubr.bf16.mxu0 0
      %1435 = vmatmul.mubr.bf16.gmra.mxu0 %v595
      %v1436 = vpop.f32.mrf.mxu0
      %v1437 = vadd.f32 0.0, %v1436
      %v1438 = vpop.f32.mrf.mxu0
      %v1439 = vadd.f32 0.0, %v1438
      %v1440 = vpop.f32.mrf.mxu0
      %v1441 = vadd.f32 0.0, %v1440
      %v1442 = vpop.f32.mrf.mxu0
      %v1443 = vadd.f32 0.0, %v1442
      %1444 = vdwg.mxu0
      %v1445 = vadd.f32 %v1279, %v1427
      %v1446 = vadd.f32 %v1281, %v1429
      %v1447 = vadd.f32 %v1283, %v1431
      %v1448 = vadd.f32 %v1285, %v1433
      %v1449 = vadd.f32 %v1289, %v1437
      %v1450 = vadd.f32 %v1291, %v1439
      %v1451 = vadd.f32 %v1293, %v1441
      %v1452 = vadd.f32 %v1295, %v1443
      %s1453 = scalar_lea.vmem %s4, 64
      %v1454 = vld [vmem:[%s1453] sm:$0xf]
      %v1455 = vld [vmem:[%s1453 + $0x4] sm:$0xf]
      %v1456 = vld [vmem:[%s1453 + $0x8] sm:$0xf]
      %v1457 = vld [vmem:[%s1453 + $0xc] sm:$0xf]
      %s1458 = scalar_lea.vmem %s5, 160
      %v1459 = vld [vmem:[%s1458] sm:$0xff]
      %v1460 = vld [vmem:[%s1458 + $0x8] sm:$0xff]
      %v1461 = vld [vmem:[%s1458 + $0x10] sm:$0xff]
      %v1462 = vld [vmem:[%s1458 + $0x18] sm:$0xff]
      %v1463 = vpack.c.bf16 %v1447, %v1445
      %v1464 = vpack.c.bf16 %v1448, %v1446
      %v1465 = vpack.c.bf16 %v1451, %v1449
      %v1466 = vpack.c.bf16 %v1452, %v1450
      %1468 = vset.pattern.permute.xlu0 0
      %1469 = vperm.xlu0 %1468, %v1459
      %v1470 = vpop.permute.xlu0 %1469
      %1473 = vset.pattern.permute.xlu0 0
      %1474 = vperm.xlu0 %1473, %v1460
      %v1475 = vpop.permute.xlu0 %1474
      %1478 = vset.pattern.permute.xlu0 0
      %1479 = vperm.xlu0 %1478, %v1461
      %v1480 = vpop.permute.xlu0 %1479
      %1483 = vset.pattern.permute.xlu0 0
      %1484 = vperm.xlu0 %1483, %v1462
      %v1485 = vpop.permute.xlu0 %1484
      %v1491 = vunpack.c.l.b16 %v1454
      %v1492 = vunpack.c.l.b16 %v1455
      %v1493 = vunpack.c.l.b16 %v1456
      %v1494 = vunpack.c.l.b16 %v1457
      %v1495 = vpack.c.b16 %v1492, %v1491
      %v1496 = vpack.c.b16 %v1494, %v1493
      %1499 = vxpose.xlu0.c.b16.start [1/8] %v1495, 128
      %1500 = vxpose.xlu0.c.b16.cont [2/8] %v1496, 128
      %1501 = vxpose.xlu0.c.b16.cont [3/8] 0, 128
      %1502 = vxpose.xlu0.c.b16.cont [4/8] 0, 128
      %1503 = vxpose.xlu0.c.b16.cont [5/8] 0, 128
      %1504 = vxpose.xlu0.c.b16.cont [6/8] 0, 128
      %1505 = vxpose.xlu0.c.b16.cont [7/8] 0, 128
      %1506 = vxpose.xlu0.c.b16.end [8/8] 0, 128
      %v1507 = vpop.trf.xlu0
      %v1508 = vpop.trf.xlu0
      %v1509 = vpop.trf.xlu0
      %v1510 = vpop.trf.xlu0
      %v1511 = vpop.trf.xlu0
      %v1512 = vpop.trf.xlu0
      %v1513 = vpop.trf.xlu0
      %v1514 = vpop.trf.xlu0
      %v1516 = vsel %vm473, %v1507, 0
      %v1519 = vsel %vm473, %v1508, 0
      %1521 = vmatprep.subr.bf16.mxu0 0
      %1522 = vmatpush1.bf16.msra.mxu0 0
      %1523 = vmatprep.subr.bf16.mxu0 0
      %1524 = vmatpush1.bf16.msra.mxu0 0
      %1525 = vmatprep.subr.bf16.mxu0 0
      %1526 = vmatpush1.bf16.msra.mxu0 0
      %1527 = vmatprep.subr.bf16.mxu0 0
      %1528 = vmatpush1.bf16.msra.mxu0 0
      %1529 = vmatprep.subr.bf16.mxu0 0
      %1530 = vmatpush1.bf16.msra.mxu0 0
      %1531 = vmatprep.subr.bf16.mxu0 0
      %1532 = vmatpush1.bf16.msra.mxu0 0
      %1533 = vmatprep.subr.bf16.mxu0 %v1466
      %1534 = vmatpush1.bf16.msra.mxu0 %v1465
      %1535 = vmatprep.subr.bf16.mxu0 %v1464
      %1536 = vmatpush1.bf16.msra.mxu0 %v1463
      %1537 = vmatprep.subr.bf16.mxu0 0
      %1538 = vmatpush2.bf16.msra.mxu0 0
      %1539 = vmatprep.subr.bf16.mxu0 0
      %1540 = vmatpush2.bf16.msra.mxu0 0
      %1541 = vmatprep.subr.bf16.mxu0 0
      %1542 = vmatpush2.bf16.msra.mxu0 0
      %1543 = vmatprep.subr.bf16.mxu0 0
      %1544 = vmatpush2.bf16.msra.mxu0 0
      %1545 = vmatprep.subr.bf16.mxu0 0
      %1546 = vmatpush2.bf16.msra.mxu0 0
      %1547 = vmatprep.subr.bf16.mxu0 0
      %1548 = vmatpush2.bf16.msra.mxu0 0
      %1549 = vmatprep.subr.bf16.mxu0 0
      %1550 = vmatpush2.bf16.msra.mxu0 0
      %1551 = vmatprep.subr.bf16.mxu0 0
      %1552 = vmatpush2.bf16.msra.mxu0 0
      %1553 = vmatprep.mubr.bf16.mxu0 0
      %1554 = vmatmul.mubr.bf16.gmra.mxu0 %v1516
      %v1555 = vpop.f32.mrf.mxu0
      %v1556 = vadd.f32 %v1470, %v1555
      %v1557 = vpop.f32.mrf.mxu0
      %v1558 = vadd.f32 %v1470, %v1557
      %v1559 = vpop.f32.mrf.mxu0
      %v1560 = vadd.f32 %v1475, %v1559
      %v1561 = vpop.f32.mrf.mxu0
      %v1562 = vadd.f32 %v1475, %v1561
      %1563 = vmatprep.mubr.bf16.mxu0 0
      %1564 = vmatmul.mubr.bf16.gmra.mxu0 %v1519
      %v1565 = vpop.f32.mrf.mxu0
      %v1566 = vadd.f32 %v1480, %v1565
      %v1567 = vpop.f32.mrf.mxu0
      %v1568 = vadd.f32 %v1480, %v1567
      %v1569 = vpop.f32.mrf.mxu0
      %v1570 = vadd.f32 %v1485, %v1569
      %v1571 = vpop.f32.mrf.mxu0
      %v1572 = vadd.f32 %v1485, %v1571
      %1573 = vdwg.mxu0
      %s1574 = scalar_lea.vmem %s4, 80
      %v1575 = vld [vmem:[%s1574] sm:$0xf]
      %v1576 = vld [vmem:[%s1574 + $0x4] sm:$0xf]
      %v1577 = vld [vmem:[%s1574 + $0x8] sm:$0xf]
      %v1578 = vld [vmem:[%s1574 + $0xc] sm:$0xf]
      %s1579 = scalar_lea.vmem %s5, 192
      %v1580 = vld [vmem:[%s1579] sm:$0xff]
      %v1581 = vld [vmem:[%s1579 + $0x8] sm:$0xff]
      %v1582 = vld [vmem:[%s1579 + $0x10] sm:$0xff]
      %v1583 = vld [vmem:[%s1579 + $0x18] sm:$0xff]
      %v1584 = vpack.c.bf16 %v1560, %v1556
      %v1585 = vpack.c.bf16 %v1562, %v1558
      %v1586 = vpack.c.bf16 %v1570, %v1566
      %v1587 = vpack.c.bf16 %v1572, %v1568
      %1589 = vset.pattern.permute.xlu0 0
      %1590 = vperm.xlu0 %1589, %v1580
      %v1591 = vpop.permute.xlu0 %1590
      %1594 = vset.pattern.permute.xlu0 0
      %1595 = vperm.xlu0 %1594, %v1581
      %v1596 = vpop.permute.xlu0 %1595
      %1599 = vset.pattern.permute.xlu0 0
      %1600 = vperm.xlu0 %1599, %v1582
      %v1601 = vpop.permute.xlu0 %1600
      %1604 = vset.pattern.permute.xlu0 0
      %1605 = vperm.xlu0 %1604, %v1583
      %v1606 = vpop.permute.xlu0 %1605
      %v1612 = vunpack.c.l.b16 %v1575
      %v1613 = vunpack.c.l.b16 %v1576
      %v1614 = vunpack.c.l.b16 %v1577
      %v1615 = vunpack.c.l.b16 %v1578
      %v1616 = vpack.c.b16 %v1613, %v1612
      %v1617 = vpack.c.b16 %v1615, %v1614
      %1620 = vxpose.xlu0.c.b16.start [1/8] %v1616, 128
      %1621 = vxpose.xlu0.c.b16.cont [2/8] %v1617, 128
      %1622 = vxpose.xlu0.c.b16.cont [3/8] 0, 128
      %1623 = vxpose.xlu0.c.b16.cont [4/8] 0, 128
      %1624 = vxpose.xlu0.c.b16.cont [5/8] 0, 128
      %1625 = vxpose.xlu0.c.b16.cont [6/8] 0, 128
      %1626 = vxpose.xlu0.c.b16.cont [7/8] 0, 128
      %1627 = vxpose.xlu0.c.b16.end [8/8] 0, 128
      %v1628 = vpop.trf.xlu0
      %v1629 = vpop.trf.xlu0
      %v1630 = vpop.trf.xlu0
      %v1631 = vpop.trf.xlu0
      %v1632 = vpop.trf.xlu0
      %v1633 = vpop.trf.xlu0
      %v1634 = vpop.trf.xlu0
      %v1635 = vpop.trf.xlu0
      %v1637 = vsel %vm473, %v1628, 0
      %v1640 = vsel %vm473, %v1629, 0
      %1642 = vmatprep.subr.bf16.mxu0 0
      %1643 = vmatpush1.bf16.msra.mxu0 0
      %1644 = vmatprep.subr.bf16.mxu0 0
      %1645 = vmatpush1.bf16.msra.mxu0 0
      %1646 = vmatprep.subr.bf16.mxu0 0
      %1647 = vmatpush1.bf16.msra.mxu0 0
      %1648 = vmatprep.subr.bf16.mxu0 0
      %1649 = vmatpush1.bf16.msra.mxu0 0
      %1650 = vmatprep.subr.bf16.mxu0 0
      %1651 = vmatpush1.bf16.msra.mxu0 0
      %1652 = vmatprep.subr.bf16.mxu0 0
      %1653 = vmatpush1.bf16.msra.mxu0 0
      %1654 = vmatprep.subr.bf16.mxu0 %v1587
      %1655 = vmatpush1.bf16.msra.mxu0 %v1586
      %1656 = vmatprep.subr.bf16.mxu0 %v1585
      %1657 = vmatpush1.bf16.msra.mxu0 %v1584
      %1658 = vmatprep.subr.bf16.mxu0 0
      %1659 = vmatpush2.bf16.msra.mxu0 0
      %1660 = vmatprep.subr.bf16.mxu0 0
      %1661 = vmatpush2.bf16.msra.mxu0 0
      %1662 = vmatprep.subr.bf16.mxu0 0
      %1663 = vmatpush2.bf16.msra.mxu0 0
      %1664 = vmatprep.subr.bf16.mxu0 0
      %1665 = vmatpush2.bf16.msra.mxu0 0
      %1666 = vmatprep.subr.bf16.mxu0 0
      %1667 = vmatpush2.bf16.msra.mxu0 0
      %1668 = vmatprep.subr.bf16.mxu0 0
      %1669 = vmatpush2.bf16.msra.mxu0 0
      %1670 = vmatprep.subr.bf16.mxu0 0
      %1671 = vmatpush2.bf16.msra.mxu0 0
      %1672 = vmatprep.subr.bf16.mxu0 0
      %1673 = vmatpush2.bf16.msra.mxu0 0
      %1674 = vmatprep.mubr.bf16.mxu0 0
      %1675 = vmatmul.mubr.bf16.gmra.mxu0 %v1637
      %v1676 = vpop.f32.mrf.mxu0
      %v1677 = vadd.f32 %v1591, %v1676
      %v1678 = vpop.f32.mrf.mxu0
      %v1679 = vadd.f32 %v1591, %v1678
      %v1680 = vpop.f32.mrf.mxu0
      %v1681 = vadd.f32 %v1596, %v1680
      %v1682 = vpop.f32.mrf.mxu0
      %v1683 = vadd.f32 %v1596, %v1682
      %1684 = vmatprep.mubr.bf16.mxu0 0
      %1685 = vmatmul.mubr.bf16.gmra.mxu0 %v1640
      %v1686 = vpop.f32.mrf.mxu0
      %v1687 = vadd.f32 %v1601, %v1686
      %v1688 = vpop.f32.mrf.mxu0
      %v1689 = vadd.f32 %v1601, %v1688
      %v1690 = vpop.f32.mrf.mxu0
      %v1691 = vadd.f32 %v1606, %v1690
      %v1692 = vpop.f32.mrf.mxu0
      %v1693 = vadd.f32 %v1606, %v1692
      %1694 = vdwg.mxu0
      %v1695 = vpack.c.bf16 %v1681, %v1677
      %v1696 = vpack.c.bf16 %v1683, %v1679
      %v1697 = vpack.c.bf16 %v1691, %v1687
      %v1698 = vpack.c.bf16 %v1693, %v1689
      %1699 = vmatprep.subr.bf16.mxu0 0
      %1700 = vmatpush1.bf16.msra.mxu0 0
      %1701 = vmatprep.subr.bf16.mxu0 0
      %1702 = vmatpush1.bf16.msra.mxu0 0
      %1703 = vmatprep.subr.bf16.mxu0 0
      %1704 = vmatpush1.bf16.msra.mxu0 0
      %1705 = vmatprep.subr.bf16.mxu0 0
      %1706 = vmatpush1.bf16.msra.mxu0 0
      %1707 = vmatprep.subr.bf16.mxu0 0
      %1708 = vmatpush1.bf16.msra.mxu0 0
      %1709 = vmatprep.subr.bf16.mxu0 0
      %1710 = vmatpush1.bf16.msra.mxu0 0
      %1711 = vmatprep.subr.bf16.mxu0 %v1698
      %1712 = vmatpush1.bf16.msra.mxu0 %v1697
      %1713 = vmatprep.subr.bf16.mxu0 %v1696
      %1714 = vmatpush1.bf16.msra.mxu0 %v1695
      %1715 = vmatprep.subr.bf16.mxu0 0
      %1716 = vmatpush2.bf16.msra.mxu0 0
      %1717 = vmatprep.subr.bf16.mxu0 0
      %1718 = vmatpush2.bf16.msra.mxu0 0
      %1719 = vmatprep.subr.bf16.mxu0 0
      %1720 = vmatpush2.bf16.msra.mxu0 0
      %1721 = vmatprep.subr.bf16.mxu0 0
      %1722 = vmatpush2.bf16.msra.mxu0 0
      %1723 = vmatprep.subr.bf16.mxu0 0
      %1724 = vmatpush2.bf16.msra.mxu0 0
      %1725 = vmatprep.subr.bf16.mxu0 0
      %1726 = vmatpush2.bf16.msra.mxu0 0
      %1727 = vmatprep.subr.bf16.mxu0 0
      %1728 = vmatpush2.bf16.msra.mxu0 0
      %1729 = vmatprep.subr.bf16.mxu0 0
      %1730 = vmatpush2.bf16.msra.mxu0 0
      %1731 = vmatprep.mubr.bf16.mxu0 0
      %1732 = vmatmul.mubr.bf16.gmra.mxu0 %v475
      %v1733 = vpop.f32.mrf.mxu0
      %v1734 = vadd.f32 0.0, %v1733
      %v1735 = vpop.f32.mrf.mxu0
      %v1736 = vadd.f32 0.0, %v1735
      %v1737 = vpop.f32.mrf.mxu0
      %v1738 = vadd.f32 0.0, %v1737
      %v1739 = vpop.f32.mrf.mxu0
      %v1740 = vadd.f32 0.0, %v1739
      %1741 = vdwg.mxu0
      %v1742 = vmax.f32 %v1734, %v1738
      %v1743 = vrot.slane %v1742, 4
      %v1744 = vmax.f32 %v1742, %v1743
      %v1745 = vrot.slane %v1744, 2
      %v1746 = vmax.f32 %v1744, %v1745
      %v1747 = vrot.slane %v1746, 1
      %v1748 = vmax.f32 %v1746, %v1747
      %v1749 = vmax.f32 %v1736, %v1740
      %v1750 = vrot.slane %v1749, 4
      %v1751 = vmax.f32 %v1749, %v1750
      %v1752 = vrot.slane %v1751, 2
      %v1753 = vmax.f32 %v1751, %v1752
      %v1754 = vrot.slane %v1753, 1
      %v1755 = vmax.f32 %v1753, %v1754
      %v1756 = vsub.f32 %v1734, %v1748
      %v1757 = vsub.f32 %v1736, %v1755
      %v1758 = vsub.f32 %v1738, %v1748
      %v1759 = vsub.f32 %v1740, %v1755
      %v1760 = vmul.f32 %v1756, 1.442695
      %v1761 = vpow.pop %v1760
      %v1762 = vmul.f32 %v1757, 1.442695
      %v1763 = vpow.pop %v1762
      %v1764 = vmul.f32 %v1758, 1.442695
      %v1765 = vpow.pop %v1764
      %v1766 = vmul.f32 %v1759, 1.442695
      %v1767 = vpow.pop %v1766
      %v1768 = vadd.f32 %v1761, %v1765
      %v1769 = vrot.slane %v1768, 4
      %v1770 = vadd.f32 %v1768, %v1769
      %v1771 = vrot.slane %v1770, 2
      %v1772 = vadd.f32 %v1770, %v1771
      %v1773 = vrot.slane %v1772, 1
      %v1774 = vadd.f32 %v1772, %v1773
      %v1775 = vadd.f32 %v1763, %v1767
      %v1776 = vrot.slane %v1775, 4
      %v1777 = vadd.f32 %v1775, %v1776
      %v1778 = vrot.slane %v1777, 2
      %v1779 = vadd.f32 %v1777, %v1778
      %v1780 = vrot.slane %v1779, 1
      %v1781 = vadd.f32 %v1779, %v1780
      %v1782 = vrcp.pop %v1774
      %v1783 = vrcp.pop %v1781
      %v1784 = vmul.f32 %v1761, %v1782
      %v1785 = vmul.f32 %v1763, %v1783
      %v1786 = vmul.f32 %v1765, %v1782
      %v1787 = vmul.f32 %v1767, %v1783
      %v1788 = vpack.c.bf16 %v1786, %v1784
      %v1789 = vpack.c.bf16 %v1787, %v1785
      %1790 = vmatprep.subr.bf16.mxu0 0
      %1791 = vmatpush1.bf16.msra.mxu0 0
      %1792 = vmatprep.subr.bf16.mxu0 0
      %1793 = vmatpush1.bf16.msra.mxu0 0
      %1794 = vmatprep.subr.bf16.mxu0 0
      %1795 = vmatpush1.bf16.msra.mxu0 0
      %1796 = vmatprep.subr.bf16.mxu0 0
      %1797 = vmatpush1.bf16.msra.mxu0 0
      %1798 = vmatprep.subr.bf16.mxu0 0
      %1799 = vmatpush1.bf16.msra.mxu0 0
      %1800 = vmatprep.subr.bf16.mxu0 0
      %1801 = vmatpush1.bf16.msra.mxu0 0
      %1802 = vmatprep.subr.bf16.mxu0 0
      %1803 = vmatpush1.bf16.msra.mxu0 0
      %1804 = vmatprep.subr.bf16.mxu0 %v1789
      %1805 = vmatpush1.bf16.msra.mxu0 %v1788
      %1806 = vmatprep.subr.bf16.mxu0 0
      %1807 = vmatpush2.bf16.msra.mxu0 0
      %1808 = vmatprep.subr.bf16.mxu0 0
      %1809 = vmatpush2.bf16.msra.mxu0 0
      %1810 = vmatprep.subr.bf16.mxu0 0
      %1811 = vmatpush2.bf16.msra.mxu0 0
      %1812 = vmatprep.subr.bf16.mxu0 0
      %1813 = vmatpush2.bf16.msra.mxu0 0
      %1814 = vmatprep.subr.bf16.mxu0 0
      %1815 = vmatpush2.bf16.msra.mxu0 0
      %1816 = vmatprep.subr.bf16.mxu0 0
      %1817 = vmatpush2.bf16.msra.mxu0 0
      %1818 = vmatprep.subr.bf16.mxu0 0
      %1819 = vmatpush2.bf16.msra.mxu0 0
      %1820 = vmatprep.subr.bf16.mxu0 0
      %1821 = vmatpush2.bf16.msra.mxu0 0
      %1822 = vmatprep.mubr.bf16.mxu0 0
      %1823 = vmatmul.mubr.bf16.gmra.mxu0 %v592
      %v1824 = vpop.f32.mrf.mxu0
      %v1825 = vadd.f32 0.0, %v1824
      %v1826 = vpop.f32.mrf.mxu0
      %v1827 = vadd.f32 0.0, %v1826
      %v1828 = vpop.f32.mrf.mxu0
      %v1829 = vadd.f32 0.0, %v1828
      %v1830 = vpop.f32.mrf.mxu0
      %v1831 = vadd.f32 0.0, %v1830
      %1832 = vmatprep.mubr.bf16.mxu0 0
      %1833 = vmatmul.mubr.bf16.gmra.mxu0 %v595
      %v1834 = vpop.f32.mrf.mxu0
      %v1835 = vadd.f32 0.0, %v1834
      %v1836 = vpop.f32.mrf.mxu0
      %v1837 = vadd.f32 0.0, %v1836
      %v1838 = vpop.f32.mrf.mxu0
      %v1839 = vadd.f32 0.0, %v1838
      %v1840 = vpop.f32.mrf.mxu0
      %v1841 = vadd.f32 0.0, %v1840
      %1842 = vdwg.mxu0
      %v1843 = vadd.f32 %v1677, %v1825
      %v1844 = vadd.f32 %v1679, %v1827
      %v1845 = vadd.f32 %v1681, %v1829
      %v1846 = vadd.f32 %v1683, %v1831
      %v1847 = vadd.f32 %v1687, %v1835
      %v1848 = vadd.f32 %v1689, %v1837
      %v1849 = vadd.f32 %v1691, %v1839
      %v1850 = vadd.f32 %v1693, %v1841
      %v1851 = vld [vmem:[%s6] sm:$0xf]
      %v1852 = vld [vmem:[%s6 + $0x4] sm:$0xf]
      %v1853 = vld [vmem:[%s6 + $0x8] sm:$0xf]
      %v1854 = vld [vmem:[%s6 + $0xc] sm:$0xf]
      %v1855 = vpack.c.bf16 %v1845, %v1843
      %v1856 = vpack.c.bf16 %v1846, %v1844
      %v1857 = vpack.c.bf16 %v1849, %v1847
      %v1858 = vpack.c.bf16 %v1850, %v1848
      %v1859 = vld [vmem:[%s7] sm:$0x7]
      %1861 = vset.pattern.permute.xlu0 0
      %1862 = vperm.xlu0 %1861, %v1859
      %v1863 = vpop.permute.xlu0 %1862
      %v1869 = vunpack.c.l.b16 %v1851
      %v1870 = vunpack.c.l.b16 %v1852
      %v1871 = vunpack.c.l.b16 %v1853
      %v1872 = vunpack.c.l.b16 %v1854
      %v1873 = vpack.c.b16 %v1870, %v1869
      %v1874 = vpack.c.b16 %v1872, %v1871
      %1877 = vxpose.xlu0.c.b16.start [1/8] %v1873, 128
      %1878 = vxpose.xlu0.c.b16.cont [2/8] %v1874, 128
      %1879 = vxpose.xlu0.c.b16.cont [3/8] 0, 128
      %1880 = vxpose.xlu0.c.b16.cont [4/8] 0, 128
      %1881 = vxpose.xlu0.c.b16.cont [5/8] 0, 128
      %1882 = vxpose.xlu0.c.b16.cont [6/8] 0, 128
      %1883 = vxpose.xlu0.c.b16.cont [7/8] 0, 128
      %1884 = vxpose.xlu0.c.b16.end [8/8] 0, 128
      %v1885 = vpop.trf.xlu0
      %v1886 = vpop.trf.xlu0
      %v1887 = vpop.trf.xlu0
      %v1888 = vpop.trf.xlu0
      %v1889 = vpop.trf.xlu0
      %v1890 = vpop.trf.xlu0
      %v1891 = vpop.trf.xlu0
      %v1892 = vpop.trf.xlu0
      %v1894 = vsel %vm473, %v1885, 0
      %1896 = vmatprep.subr.bf16.mxu0 0
      %1897 = vmatpush1.bf16.msra.mxu0 0
      %1898 = vmatprep.subr.bf16.mxu0 0
      %1899 = vmatpush1.bf16.msra.mxu0 0
      %1900 = vmatprep.subr.bf16.mxu0 0
      %1901 = vmatpush1.bf16.msra.mxu0 0
      %1902 = vmatprep.subr.bf16.mxu0 0
      %1903 = vmatpush1.bf16.msra.mxu0 0
      %1904 = vmatprep.subr.bf16.mxu0 0
      %1905 = vmatpush1.bf16.msra.mxu0 0
      %1906 = vmatprep.subr.bf16.mxu0 0
      %1907 = vmatpush1.bf16.msra.mxu0 0
      %1908 = vmatprep.subr.bf16.mxu0 %v1858
      %1909 = vmatpush1.bf16.msra.mxu0 %v1857
      %1910 = vmatprep.subr.bf16.mxu0 %v1856
      %1911 = vmatpush1.bf16.msra.mxu0 %v1855
      %1912 = vmatprep.subr.bf16.mxu0 0
      %1913 = vmatpush2.bf16.msra.mxu0 0
      %1914 = vmatprep.subr.bf16.mxu0 0
      %1915 = vmatpush2.bf16.msra.mxu0 0
      %1916 = vmatprep.subr.bf16.mxu0 0
      %1917 = vmatpush2.bf16.msra.mxu0 0
      %1918 = vmatprep.subr.bf16.mxu0 0
      %1919 = vmatpush2.bf16.msra.mxu0 0
      %1920 = vmatprep.subr.bf16.mxu0 0
      %1921 = vmatpush2.bf16.msra.mxu0 0
      %1922 = vmatprep.subr.bf16.mxu0 0
      %1923 = vmatpush2.bf16.msra.mxu0 0
      %1924 = vmatprep.subr.bf16.mxu0 0
      %1925 = vmatpush2.bf16.msra.mxu0 0
      %1926 = vmatprep.subr.bf16.mxu0 0
      %1927 = vmatpush2.bf16.msra.mxu0 0
      %1928 = vmatprep.mubr.bf16.mxu0 0
      %1929 = vmatmul.mubr.bf16.gmra.mxu0 %v1894
      %v1930 = vpop.f32.mrf.mxu0
      %v1931 = vadd.f32 %v1863, %v1930
      %v1932 = vpop.f32.mrf.mxu0
      %v1933 = vadd.f32 %v1863, %v1932
      %v1934 = vpop.f32.mrf.mxu0
      %v1935 = vpop.f32.mrf.mxu0
      %1936 = vdwg.mxu0
      %v1939 = vcombine.low %v1931, %v1933
      %1941 = vst [vmem:[%s343] sm:$0x77] %v1939
      %s1942 = smul.u32 2, %s24
      %p1943 = scmp.lt.s32.totalorder %s23, 1
      %s1944 = scalar_select %p1943, %s23, 1
      %p1945 = scmp.lt.s32.totalorder %s1942, 1
      %s1946 = scalar_select %p1945, %s1942, 1
      %s1947 = smul.addr %s1944, 2
      %s1948 = sadd.s32 %s1946, %s1947
      %s1949 = smul.addr %s1948, 4
      %s1950 = scalar_lea.vmem %s8, %s1949
      // Predicated region
      $region53: #{only_pga_forward.1} parent=51 // pred_check
        %p1951 = pneg %p226
      $region54: #{only_pga_forward.1} parent=51 // pred_check_branch
        %1953 = sbr.rel (%p1951) target = $region56
      $region55: #{only_pga_forward.1} parent=51 // pred_region
        %s1954 = smul.u32 2, %s24
      $region56: #{only_pga_forward.1} parent=51 // pred_fallthru
        _
    $region52: #{only_pga_forward.1} parent=5 // pred_fallthru
      _
    %p1955 = scmp.le.s32.totalorder 2, %s14
    // Predicated region
    $region57: #{only_pga_forward.1} parent=5 // pred_check
      %p1956 = pneg %p1955
    $region58: #{only_pga_forward.1} parent=5 // pred_check_branch
      %1958 = sbr.rel (%p1956) target = $region60
    $region59: #{only_pga_forward.1} parent=5 // pred_region
      %s1959 = ssub.s32 %s14, 2
      // Predicated region
      $region61: #{only_pga_forward.1} parent=59 // pred_check
        %p1960 = pneg %p232
      $region62: #{only_pga_forward.1} parent=59 // pred_check_branch
        %1962 = sbr.rel (%p1960) target = $region64
      $region63: #{only_pga_forward.1} parent=59 // pred_region
        %s1963 = smul.u32 2, %s26
        %p1964 = scmp.lt.s32.totalorder %s25, 1
        %s1965 = scalar_select %p1964, %s25, 1
        %p1966 = scmp.lt.s32.totalorder %s1963, 1
        %s1967 = scalar_select %p1966, %s1963, 1
        %s1968 = smul.addr %s1965, 2
        %s1969 = sadd.s32 %s1967, %s1968
        %s1970 = smul.addr %s1969, 4
        %s1971 = scalar_lea.vmem %s8, %s1970
      $region64: #{only_pga_forward.1} parent=59 // pred_fallthru
        _
    $region60: #{only_pga_forward.1} parent=5 // pred_fallthru
      _
  $region6: #{only_pga_forward.1} parent=0 // loop_footer
    %s18 = sadd.s32 1, %s14
  $region7: #{only_pga_forward.1} parent=0 // loop_footer_branch
    %13 = sbr.rel target = $region3
  $region8: #{only_pga_forward.1} parent=0 // loop_exit
    _

</llo_original>
